<compile_context>
chip_gen: v6e
topology: v6e:2x2x1
jax: 0.10.0
libtpu: 0.0.40
codegen_flags: <defaults>
</compile_context>

<pallas_src>
import jax
import jax.numpy as jnp
from jax.experimental import pallas as pl
from jax.experimental.pallas import tpu as pltpu


# --------------------------------------------------------------------------
# Fused decoder-step kernel
# --------------------------------------------------------------------------
def make_decoder_kernel(L, B, T, FS, E, H, HP, A, V):
    """Returns the fused kernel, closed over static shapes.

    Ref order: 10 fixed inputs, 4*L GRU weight refs, 2 output-proj refs,
    then 4 output refs.
    """

    def kernel(*refs):
        (emb_ref, hid_ref, appf_ref, motf_ref,
         wdec_ref, bdec_ref, wenc_ref, benc_ref, wfin_ref, bfin_ref) = refs[:10]
        gru_refs = refs[10:10 + 4 * L]
        out_w_ref = refs[10 + 4 * L]
        out_b_ref = refs[11 + 4 * L]
        probs_ref, hidnew_ref, attnw_ref, ctx_ref = refs[12 + 4 * L:]

        f32 = jnp.float32
        bf16 = jnp.bfloat16

        # ---- batched temporal attention (appearance ++ motion on batch) ----
        last_h = hid_ref[L - 1]                                        # (B, H)
        feats_flat = jnp.concatenate([appf_ref[...], motf_ref[...]],
                                     axis=0)                          # (2B*T, F)

        Wh = jnp.dot(last_h.astype(bf16), wdec_ref[...],
                     preferred_element_type=f32) + bdec_ref[...]       # (B, A)
        Wh2 = jnp.concatenate([Wh, Wh], axis=0)                        # (2B, A)

        # encoder projection as one 2-D MXU matmul
        Uv = jnp.dot(feats_flat.astype(bf16), wenc_ref[...],
                     preferred_element_type=f32) + benc_ref[...]       # (2B*T, A)
        Uv = Uv.reshape(2 * B, T, A)                                   # sublane-aligned view

        act = jnp.tanh(Wh2[:, None, :] + Uv)                           # (2B, T, A)
        energies = (jnp.sum(act * wfin_ref[...][None, :, :], axis=-1)
                    + bfin_ref[0, 0])                                  # (2B, T)

        m = jnp.max(energies, axis=1, keepdims=True)
        e = jnp.exp(energies - m)
        w = e * pl.reciprocal(jnp.sum(e, axis=1, keepdims=True), approx=True)
        attnw_ref[...] = w                                             # (2B, T)

        feats3 = feats_flat.reshape(2 * B, T, FS)                      # (2B, T, F)
        attn = jnp.sum(feats3 * w[:, :, None], axis=1)                 # (2B, F)
        app_attn = attn[:B]
        mot_attn = attn[B:]
        ctx = jnp.concatenate([app_attn, mot_attn], axis=1)            # (B, 2F)
        ctx_ref[...] = ctx

        # ---- L-layer GRU, one time step; gates padded to HP lanes each ----
        x = jnp.concatenate([emb_ref[...], ctx], axis=1)               # (B, E+2F)
        pad = None if HP == H else jnp.zeros((B, HP - H), f32)
        for l in range(L):
            wih, whh, bih, bhh = gru_refs[4 * l:4 * l + 4]
            h_prev = hid_ref[l]                                        # (B, H)
            gi = jnp.dot(x.astype(bf16), wih[...],
                         preferred_element_type=f32) + bih[...]        # (B, 3*HP)
            gh = jnp.dot(h_prev.astype(bf16), whh[...],
                         preferred_element_type=f32) + bhh[...]        # (B, 3*HP)
            # vreg-aligned (128-lane) gate slices, PyTorch gate order r, z, n
            r = jax.nn.sigmoid(gi[:, 0:HP] + gh[:, 0:HP])
            z = jax.nn.sigmoid(gi[:, HP:2 * HP] + gh[:, HP:2 * HP])
            n = jnp.tanh(gi[:, 2 * HP:3 * HP] + r * gh[:, 2 * HP:3 * HP])
            h_pad = h_prev if pad is None else jnp.concatenate([h_prev, pad], axis=1)
            h_new = (1.0 - z) * n + z * h_pad                          # (B, HP); pad lanes stay 0
            hidnew_ref[l] = h_new[:, :H]
            x = h_new                                                  # padded input to next layer

        # ---- output projection + softmax over vocab ----
        logits = jnp.dot(x.astype(bf16), out_w_ref[...],
                         preferred_element_type=f32) + out_b_ref[...]  # (B, V)
        m2 = jnp.max(logits, axis=1, keepdims=True)
        e2 = jnp.exp(logits - m2)
        probs_ref[...] = e2 * pl.reciprocal(jnp.sum(e2, axis=1, keepdims=True),
                                            approx=True)

    return kernel


# --------------------------------------------------------------------------
# Forward wrapper (single fused pallas_call; embedding gather stays plain JAX)
# --------------------------------------------------------------------------
def recurrent_decoder_forward(kparams, inputs, hidden, appearance_feats, motion_feats):
    """
    inputs:            (1, B) int32 token ids
    hidden:            (L, B, H) float32 GRU hidden state
    appearance_feats:  (B, T, F) float32
    motion_feats:      (B, T, F) float32
    """
    embedding = kparams['embedding']
    embedded = embedding[inputs]                    # (1, B, E) — gather kept in XLA

    L, B, H = hidden.shape
    _, T, FS = appearance_feats.shape
    E = embedding.shape[1]
    A = kparams['attn']['wdec_t'].shape[1]
    V = kparams['out_w_t'].shape[1]
    HP = kparams['out_w_t'].shape[0]                # padded hidden width (multiple of 128)

    ap = kparams['attn']
    app_flat = appearance_feats.reshape(B * T, FS)  # free row-major reshape
    mot_flat = motion_feats.reshape(B * T, FS)

    args = [embedded[0], hidden, app_flat, mot_flat,
            ap['wdec_t'], ap['bdec'], ap['wenc_t'], ap['benc'], ap['wfin'], ap['bfin']]
    for lp in kparams['gru']:
        args += [lp['wih_t'], lp['whh_t'], lp['bih'], lp['bhh']]
    args += [kparams['out_w_t'], kparams['out_b']]

    vmem = pl.BlockSpec(memory_space=pltpu.MemorySpace.VMEM)
    smem = pl.BlockSpec(memory_space=pltpu.MemorySpace.SMEM)

    kernel = make_decoder_kernel(L, B, T, FS, E, H, HP, A, V)
    probs, hid_new, attn_w, ctx = pl.pallas_call(
        kernel,
        out_shape=(jax.ShapeDtypeStruct((B, V), jnp.float32),
                   jax.ShapeDtypeStruct((L, B, H), jnp.float32),
                   jax.ShapeDtypeStruct((2 * B, T), jnp.float32),
                   jax.ShapeDtypeStruct((B, 2 * FS), jnp.float32)),
        in_specs=[vmem] * 9 + [smem] + [vmem] * (4 * L + 2),
        out_specs=(vmem, vmem, vmem, vmem),
    )(*args)

    appearance_weights = attn_w[:B, :, None]        # (B, T, 1) — PyTorch returns only this
    context_vector = ctx[None]                      # (1, B, 2F)
    return probs, hid_new, appearance_weights, context_vector, embedded


# --------------------------------------------------------------------------
# Parameter construction / kernel-ready preparation
# --------------------------------------------------------------------------
def init_params(key, *, vocab, emb, feat, attn_size, hidden, n_layers, input_size):
    ks = jax.random.split(key, 16)
    s = 0.05
    attn_p = {
        'wdec_t': jax.random.normal(ks[0], (hidden, attn_size), jnp.float32) * s,
        'bdec':   jax.random.normal(ks[1], (1, attn_size), jnp.float32) * s,
        'wenc_t': jax.random.normal(ks[2], (feat, attn_size), jnp.float32) * s,
        'benc':   jax.random.normal(ks[3], (1, attn_size), jnp.float32) * s,
        'wfin':   jax.random.normal(ks[4], (1, attn_size), jnp.float32) * s,
        'bfin':   jax.random.normal(ks[5], (1, 1), jnp.float32) * s,
    }
    gru_layers = []
    kgru = jax.random.split(ks[6], n_layers * 4)
    for l in range(n_layers):
        in_sz = input_size if l == 0 else hidden
        gru_layers.append({
            'wih_t': jax.random.normal(kgru[4 * l + 0], (in_sz, 3 * hidden), jnp.float32) * s,
            'whh_t': jax.random.normal(kgru[4 * l + 1], (hidden, 3 * hidden), jnp.float32) * s,
            'bih':   jax.random.normal(kgru[4 * l + 2], (1, 3 * hidden), jnp.float32) * s,
            'bhh':   jax.random.normal(kgru[4 * l + 3], (1, 3 * hidden), jnp.float32) * s,
        })
    return {
        'embedding': jax.random.normal(ks[7], (vocab, emb), jnp.float32) * s,
        'attn': attn_p,
        'gru': gru_layers,
        'out_w_t': jax.random.normal(ks[8], (hidden, vocab), jnp.float32) * s,
        'out_b':   jax.random.normal(ks[9], (1, vocab), jnp.float32) * s,
    }


def _pad_gate_weight(w_t, b, H, HP, K_pad=None):
    """Pad (K, 3H)/(1, 3H) gate-packed params to (K_pad, 3*HP)/(1, 3*HP).

    Each gate block (r, z, n) is placed at lane offset g*HP so in-kernel gate
    slices are 128-lane aligned; padding is zero so padded lanes stay inert.
    """
    K = w_t.shape[0]
    Kp = K if K_pad is None else K_pad
    w_p = jnp.zeros((Kp, 3 * HP), jnp.float32)
    b_p = jnp.zeros((1, 3 * HP), jnp.float32)
    for g in range(3):
        w_p = w_p.at[:K, g * HP:g * HP + H].set(w_t[:, g * H:(g + 1) * H])
        b_p = b_p.at[:, g * HP:g * HP + H].set(b[:, g * H:(g + 1) * H])
    return w_p, b_p


def prepare_params(params, mxu_dtype=jnp.bfloat16):
    """Produce kernel-ready params: gate-padded layouts, bf16 matmul weights."""
    H = params['gru'][0]['whh_t'].shape[0]
    HP = ((H + 127) // 128) * 128
    ap = params['attn']
    kp = {
        'embedding': params['embedding'],
        'attn': {
            'wdec_t': ap['wdec_t'].astype(mxu_dtype),
            'bdec': ap['bdec'],
            'wenc_t': ap['wenc_t'].astype(mxu_dtype),
            'benc': ap['benc'],
            'wfin': ap['wfin'],
            'bfin': ap['bfin'],
        },
        'gru': [],
    }
    for l, lp in enumerate(params['gru']):
        # layer 0 consumes the (B, E+2F) input; deeper layers consume the
        # HP-padded hidden, so pad their K dimension to HP with zero rows.
        k_pad = None if l == 0 else HP
        wih_p, bih_p = _pad_gate_weight(lp['wih_t'], lp['bih'], H, HP, k_pad)
        whh_p, bhh_p = _pad_gate_weight(lp['whh_t'], lp['bhh'], H, HP, None)
        kp['gru'].append({
            'wih_t': wih_p.astype(mxu_dtype),
            'whh_t': whh_p.astype(mxu_dtype),
            'bih': bih_p,
            'bhh': bhh_p,
        })
    out_w = jnp.zeros((HP, params['out_w_t'].shape[1]), jnp.float32)
    out_w = out_w.at[:H, :].set(params['out_w_t'])
    kp['out_w_t'] = out_w.astype(mxu_dtype)
    kp['out_b'] = params['out_b']
    return kp


# --------------------------------------------------------------------------
# Pure-JAX reference (f32 weights) for correctness checking
# --------------------------------------------------------------------------
def reference_forward(params, inputs, hidden, appearance_feats, motion_feats):
    emb = params['embedding'][inputs]               # (1, B, E)
    last_h = hidden[-1]

    def attn(h, feats, ap):
        Wh = h @ ap['wdec_t'] + ap['bdec']
        Uv = jnp.einsum('btf,fa->bta', feats, ap['wenc_t']) + ap['benc']
        act = jnp.tanh(Wh[:, None, :] + Uv)
        en = jnp.sum(act * ap['wfin'][None], axis=-1) + ap['bfin'][0, 0]
        w = jax.nn.softmax(en, axis=1)
        return jnp.sum(feats * w[:, :, None], axis=1), w

    a_att, a_w = attn(last_h, appearance_feats, params['attn'])
    m_att, _ = attn(last_h, motion_feats, params['attn'])
    ctx = jnp.concatenate([a_att, m_att], axis=1)[None]
    x = jnp.concatenate([emb[0], a_att, m_att], axis=1)
    new_h = []
    for l, lp in enumerate(params['gru']):
        h = hidden[l]
        H = h.shape[1]
        gi = x @ lp['wih_t'] + lp['bih']
        gh = h @ lp['whh_t'] + lp['bhh']
        r = jax.nn.sigmoid(gi[:, :H] + gh[:, :H])
        z = jax.nn.sigmoid(gi[:, H:2 * H] + gh[:, H:2 * H])
        n = jnp.tanh(gi[:, 2 * H:] + r * gh[:, 2 * H:])
        hn = (1.0 - z) * n + z * h
        new_h.append(hn)
        x = hn
    logits = x @ params['out_w_t'] + params['out_b']
    out = jax.nn.softmax(logits, axis=1)
    return out, jnp.stack(new_h, axis=0), a_w[..., None], ctx, emb


# --------------------------------------------------------------------------
if __name__ == "__main__":
    # small, module-consistent shapes
    B = 8          # batch
    T = 8          # frame_len (encoder time steps)
    FS = 64        # feat_size
    A = 32         # attn_size (bottleneck)
    E = 32         # embedding_size
    H = 64         # decoder_hidden_size
    L = 2          # n_layers
    V = 128        # voc.num_words
    IN = E + 2 * FS  # decoder_input_size

    key = jax.random.PRNGKey(0)
    kp_key, k1, k2, k3, k4 = jax.random.split(key, 5)

    params = init_params(kp_key, vocab=V, emb=E, feat=FS, attn_size=A,
                         hidden=H, n_layers=L, input_size=IN)
    kparams = prepare_params(params)

    inputs = jax.random.randint(k1, (1, B), 0, V, dtype=jnp.int32)        # (1, B)
    hidden = jax.random.normal(k2, (L, B, H), jnp.float32)                # (L, B, H)
    appearance_feats = jax.random.normal(k3, (B, T, FS), jnp.float32)     # (B, T, F)
    motion_feats = jax.random.normal(k4, (B, T, FS), jnp.float32)         # (B, T, F)

    fwd = jax.jit(recurrent_decoder_forward)
    out, hid_new, app_w, ctx, emb = fwd(kparams, inputs, hidden,
                                        appearance_feats, motion_feats)
    jax.block_until_ready((out, hid_new, app_w, ctx, emb))

    # shape checks (match PyTorch return shapes)
    assert out.shape == (B, V)
    assert hid_new.shape == (L, B, H)
    assert app_w.shape == (B, T, 1)
    assert ctx.shape == (1, B, 2 * FS)
    assert emb.shape == (1, B, E)

    # numerical check vs. pure-JAX f32 reference (bf16 MXU weights -> loose tol)
    r_out, r_hid, r_w, r_ctx, r_emb = reference_forward(
        params, inputs, hidden, appearance_feats, motion_feats)
    assert jnp.allclose(out, r_out, atol=1e-2, rtol=1e-2)
    assert jnp.allclose(hid_new, r_hid, atol=2e-2, rtol=2e-2)
    assert jnp.allclose(app_w, r_w, atol=1e-2, rtol=1e-2)
    assert jnp.allclose(ctx, r_ctx, atol=2e-2, rtol=2e-2)
    assert jnp.allclose(emb, r_emb)
    # softmax rows sum to ~1 (approx reciprocal in kernel)
    assert jnp.allclose(jnp.sum(out, axis=1), 1.0, atol=5e-3)
    assert jnp.allclose(jnp.sum(app_w[..., 0], axis=1), 1.0, atol=5e-3)

    print("KERNEL_OK")
</pallas_src>

<mosaic_0001>
module attributes {stable_mosaic.version = 11 : i64} {
  func.func @kernel(%arg0: memref<8x32xf32, #tpu.memory_space<vmem>>, %arg1: memref<2x8x64xf32, #tpu.memory_space<vmem>>, %arg2: memref<64x64xf32, #tpu.memory_space<vmem>>, %arg3: memref<64x64xf32, #tpu.memory_space<vmem>>, %arg4: memref<64x32xbf16, #tpu.memory_space<vmem>>, %arg5: memref<1x32xf32, #tpu.memory_space<vmem>>, %arg6: memref<64x32xbf16, #tpu.memory_space<vmem>>, %arg7: memref<1x32xf32, #tpu.memory_space<vmem>>, %arg8: memref<1x32xf32, #tpu.memory_space<vmem>>, %arg9: memref<1x1xf32, #tpu.memory_space<smem>>, %arg10: memref<160x384xbf16, #tpu.memory_space<vmem>>, %arg11: memref<64x384xbf16, #tpu.memory_space<vmem>>, %arg12: memref<1x384xf32, #tpu.memory_space<vmem>>, %arg13: memref<1x384xf32, #tpu.memory_space<vmem>>, %arg14: memref<128x384xbf16, #tpu.memory_space<vmem>>, %arg15: memref<64x384xbf16, #tpu.memory_space<vmem>>, %arg16: memref<1x384xf32, #tpu.memory_space<vmem>>, %arg17: memref<1x384xf32, #tpu.memory_space<vmem>>, %arg18: memref<128x128xbf16, #tpu.memory_space<vmem>>, %arg19: memref<1x128xf32, #tpu.memory_space<vmem>>, %arg20: memref<8x128xf32, #tpu.memory_space<vmem>>, %arg21: memref<2x8x64xf32, #tpu.memory_space<vmem>>, %arg22: memref<16x8xf32, #tpu.memory_space<vmem>>, %arg23: memref<8x128xf32, #tpu.memory_space<vmem>>) attributes {dimension_semantics = [], scalar_prefetch = 0 : i64, scratch_operands = 0 : i64, tpu.core_type = #tpu.core_type<tc>} {
    %c1 = arith.constant 1 : index
    %c0 = arith.constant 0 : index
    %c0_0 = arith.constant 0 : index
    %0 = vector.load %arg1[%c1, %c0, %c0_0] : memref<2x8x64xf32, #tpu.memory_space<vmem>>, vector<1x8x64xf32>
    %1 = vector.shape_cast %0 : vector<1x8x64xf32> to vector<8x64xf32>
    %c0_1 = arith.constant 0 : index
    %c0_2 = arith.constant 0 : index
    %2 = vector.load %arg2[%c0_1, %c0_2] : memref<64x64xf32, #tpu.memory_space<vmem>>, vector<64x64xf32>
    %c0_3 = arith.constant 0 : index
    %c0_4 = arith.constant 0 : index
    %3 = vector.load %arg3[%c0_3, %c0_4] : memref<64x64xf32, #tpu.memory_space<vmem>>, vector<64x64xf32>
    %4 = tpu.concatenate %2, %3 in 0 : vector<64x64xf32>, vector<64x64xf32> -> vector<128x64xf32>
    %5 = arith.truncf %1 : vector<8x64xf32> to vector<8x64xbf16>
    %c0_5 = arith.constant 0 : index
    %c0_6 = arith.constant 0 : index
    %6 = vector.load %arg4[%c0_5, %c0_6] : memref<64x32xbf16, #tpu.memory_space<vmem>>, vector<64x32xbf16>
    %cst = arith.constant dense<0.000000e+00> : vector<8x32xf32>
    %7 = tpu.matmul %5, %6, %cst {dimension_numbers = #tpu.dot_dimension_numbers<[1], [0], [0], [1], [0, 0, 1, 1], [], []>} : vector<8x64xbf16>, vector<64x32xbf16>, vector<8x32xf32> -> vector<8x32xf32>
    %c0_7 = arith.constant 0 : index
    %c0_8 = arith.constant 0 : index
    %8 = vector.load %arg5[%c0_7, %c0_8] : memref<1x32xf32, #tpu.memory_space<vmem>>, vector<1x32xf32>
    %9 = vector.broadcast %8 : vector<1x32xf32> to vector<8x32xf32>
    %10 = arith.addf %7, %9 : vector<8x32xf32>
    %11 = tpu.concatenate %10, %10 in 0 : vector<8x32xf32>, vector<8x32xf32> -> vector<16x32xf32>
    %12 = arith.truncf %4 : vector<128x64xf32> to vector<128x64xbf16>
    %c0_9 = arith.constant 0 : index
    %c0_10 = arith.constant 0 : index
    %13 = vector.load %arg6[%c0_9, %c0_10] : memref<64x32xbf16, #tpu.memory_space<vmem>>, vector<64x32xbf16>
    %cst_11 = arith.constant dense<0.000000e+00> : vector<128x32xf32>
    %14 = tpu.matmul %12, %13, %cst_11 {dimension_numbers = #tpu.dot_dimension_numbers<[1], [0], [0], [1], [0, 0, 1, 1], [], []>} : vector<128x64xbf16>, vector<64x32xbf16>, vector<128x32xf32> -> vector<128x32xf32>
    %c0_12 = arith.constant 0 : index
    %c0_13 = arith.constant 0 : index
    %15 = vector.load %arg7[%c0_12, %c0_13] : memref<1x32xf32, #tpu.memory_space<vmem>>, vector<1x32xf32>
    %16 = vector.broadcast %15 : vector<1x32xf32> to vector<128x32xf32>
    %17 = arith.addf %14, %16 : vector<128x32xf32>
    %18 = vector.shape_cast %17 : vector<128x32xf32> to vector<16x8x32xf32>
    %19 = vector.shape_cast %11 : vector<16x32xf32> to vector<16x1x32xf32>
    %20 = vector.broadcast %19 : vector<16x1x32xf32> to vector<16x8x32xf32>
    %21 = arith.addf %20, %18 : vector<16x8x32xf32>
    %22 = math.tanh %21 : vector<16x8x32xf32>
    %c0_14 = arith.constant 0 : index
    %c0_15 = arith.constant 0 : index
    %23 = vector.load %arg8[%c0_14, %c0_15] : memref<1x32xf32, #tpu.memory_space<vmem>>, vector<1x32xf32>
    %24 = vector.shape_cast %23 : vector<1x32xf32> to vector<1x1x32xf32>
    %25 = vector.broadcast %24 : vector<1x1x32xf32> to vector<16x8x32xf32>
    %26 = arith.mulf %22, %25 : vector<16x8x32xf32>
    %cst_16 = arith.constant dense<0.000000e+00> : vector<16x8xf32>
    %27 = vector.multi_reduction <add>, %26, %cst_16 [2] : vector<16x8x32xf32> to vector<16x8xf32>
    %c0_17 = arith.constant 0 : index
    %c0_18 = arith.constant 0 : index
    %28 = memref.load %arg9[%c0_17, %c0_18] : memref<1x1xf32, #tpu.memory_space<smem>>
    %29 = vector.broadcast %28 : f32 to vector<16x8xf32>
    %30 = arith.addf %27, %29 : vector<16x8xf32>
    %cst_19 = arith.constant dense<0xFF800000> : vector<16xf32>
    %31 = vector.multi_reduction <maximumf>, %30, %cst_19 [1] : vector<16x8xf32> to vector<16xf32>
    %32 = vector.shape_cast %31 : vector<16xf32> to vector<16x1xf32>
    %33 = vector.broadcast %32 : vector<16x1xf32> to vector<16x8xf32>
    %34 = arith.subf %30, %33 : vector<16x8xf32>
    %35 = math.exp %34 : vector<16x8xf32>
    %cst_20 = arith.constant dense<0.000000e+00> : vector<16xf32>
    %36 = vector.multi_reduction <add>, %35, %cst_20 [1] : vector<16x8xf32> to vector<16xf32>
    %37 = vector.shape_cast %36 : vector<16xf32> to vector<16x1xf32>
    %38 = tpu.reciprocal %37 {approx = true} : vector<16x1xf32> -> vector<16x1xf32>
    %39 = vector.broadcast %38 : vector<16x1xf32> to vector<16x8xf32>
    %40 = arith.mulf %35, %39 : vector<16x8xf32>
    %c0_21 = arith.constant 0 : index
    %c0_22 = arith.constant 0 : index
    %41 = vector.load %arg22[%c0_21, %c0_22] : memref<16x8xf32, #tpu.memory_space<vmem>>, vector<16x8xf32>
    tpu.vector_store %arg22[%c0_21, %c0_22], %40 {strides = array<i32>} : memref<16x8xf32, #tpu.memory_space<vmem>>, vector<16x8xf32>,
    %42 = vector.shape_cast %4 : vector<128x64xf32> to vector<16x8x64xf32>
    %43 = vector.shape_cast %40 : vector<16x8xf32> to vector<16x8x1xf32>
    %44 = vector.broadcast %43 : vector<16x8x1xf32> to vector<16x8x64xf32>
    %45 = arith.mulf %42, %44 : vector<16x8x64xf32>
    %cst_23 = arith.constant dense<0.000000e+00> : vector<16x64xf32>
    %46 = vector.multi_reduction <add>, %45, %cst_23 [1] : vector<16x8x64xf32> to vector<16x64xf32>
    %47 = vector.extract_strided_slice %46 {offsets = [0, 0], sizes = [8, 64], strides = [1, 1]} : vector<16x64xf32> to vector<8x64xf32>
    %48 = vector.extract_strided_slice %46 {offsets = [8, 0], sizes = [8, 64], strides = [1, 1]} : vector<16x64xf32> to vector<8x64xf32>
    %49 = tpu.concatenate %47, %48 in 1 : vector<8x64xf32>, vector<8x64xf32> -> vector<8x128xf32>
    %c0_24 = arith.constant 0 : index
    %c0_25 = arith.constant 0 : index
    %50 = vector.load %arg23[%c0_24, %c0_25] : memref<8x128xf32, #tpu.memory_space<vmem>>, vector<8x128xf32>
    tpu.vector_store %arg23[%c0_24, %c0_25], %49 {strides = array<i32>} : memref<8x128xf32, #tpu.memory_space<vmem>>, vector<8x128xf32>,
    %c0_26 = arith.constant 0 : index
    %c0_27 = arith.constant 0 : index
    %51 = vector.load %arg0[%c0_26, %c0_27] : memref<8x32xf32, #tpu.memory_space<vmem>>, vector<8x32xf32>
    %52 = tpu.concatenate %51, %49 in 1 : vector<8x32xf32>, vector<8x128xf32> -> vector<8x160xf32>
    %cst_28 = arith.constant 0.000000e+00 : f32
    %53 = vector.broadcast %cst_28 : f32 to vector<8x64xf32>
    %c0_29 = arith.constant 0 : index
    %c0_30 = arith.constant 0 : index
    %c0_31 = arith.constant 0 : index
    %54 = vector.load %arg1[%c0_29, %c0_30, %c0_31] : memref<2x8x64xf32, #tpu.memory_space<vmem>>, vector<1x8x64xf32>
    %55 = vector.shape_cast %54 : vector<1x8x64xf32> to vector<8x64xf32>
    %56 = arith.truncf %52 : vector<8x160xf32> to vector<8x160xbf16>
    %c0_32 = arith.constant 0 : index
    %c0_33 = arith.constant 0 : index
    %57 = vector.load %arg10[%c0_32, %c0_33] : memref<160x384xbf16, #tpu.memory_space<vmem>>, vector<160x384xbf16>
    %cst_34 = arith.constant dense<0.000000e+00> : vector<8x384xf32>
    %58 = tpu.matmul %56, %57, %cst_34 {dimension_numbers = #tpu.dot_dimension_numbers<[1], [0], [0], [1], [0, 0, 1, 1], [], []>} : vector<8x160xbf16>, vector<160x384xbf16>, vector<8x384xf32> -> vector<8x384xf32>
    %c0_35 = arith.constant 0 : index
    %c0_36 = arith.constant 0 : index
    %59 = vector.load %arg12[%c0_35, %c0_36] : memref<1x384xf32, #tpu.memory_space<vmem>>, vector<1x384xf32>
    %60 = vector.broadcast %59 : vector<1x384xf32> to vector<8x384xf32>
    %61 = arith.addf %58, %60 : vector<8x384xf32>
    %62 = arith.truncf %55 : vector<8x64xf32> to vector<8x64xbf16>
    %c0_37 = arith.constant 0 : index
    %c0_38 = arith.constant 0 : index
    %63 = vector.load %arg11[%c0_37, %c0_38] : memref<64x384xbf16, #tpu.memory_space<vmem>>, vector<64x384xbf16>
    %cst_39 = arith.constant dense<0.000000e+00> : vector<8x384xf32>
    %64 = tpu.matmul %62, %63, %cst_39 {dimension_numbers = #tpu.dot_dimension_numbers<[1], [0], [0], [1], [0, 0, 1, 1], [], []>} : vector<8x64xbf16>, vector<64x384xbf16>, vector<8x384xf32> -> vector<8x384xf32>
    %c0_40 = arith.constant 0 : index
    %c0_41 = arith.constant 0 : index
    %65 = vector.load %arg13[%c0_40, %c0_41] : memref<1x384xf32, #tpu.memory_space<vmem>>, vector<1x384xf32>
    %66 = vector.broadcast %65 : vector<1x384xf32> to vector<8x384xf32>
    %67 = arith.addf %64, %66 : vector<8x384xf32>
    %68 = vector.extract_strided_slice %61 {offsets = [0, 0], sizes = [8, 128], strides = [1, 1]} : vector<8x384xf32> to vector<8x128xf32>
    %69 = vector.extract_strided_slice %67 {offsets = [0, 0], sizes = [8, 128], strides = [1, 1]} : vector<8x384xf32> to vector<8x128xf32>
    %70 = arith.addf %68, %69 : vector<8x128xf32>
    %71 = arith.negf %70 : vector<8x128xf32>
    %72 = math.exp %71 : vector<8x128xf32>
    %cst_42 = arith.constant 1.000000e+00 : f32
    %73 = vector.broadcast %cst_42 : f32 to vector<8x128xf32>
    %74 = arith.addf %73, %72 : vector<8x128xf32>
    %75 = arith.divf %73, %74 : vector<8x128xf32>
    %76 = vector.extract_strided_slice %61 {offsets = [0, 128], sizes = [8, 128], strides = [1, 1]} : vector<8x384xf32> to vector<8x128xf32>
    %77 = vector.extract_strided_slice %67 {offsets = [0, 128], sizes = [8, 128], strides = [1, 1]} : vector<8x384xf32> to vector<8x128xf32>
    %78 = arith.addf %76, %77 : vector<8x128xf32>
    %79 = arith.negf %78 : vector<8x128xf32>
    %80 = math.exp %79 : vector<8x128xf32>
    %cst_43 = arith.constant 1.000000e+00 : f32
    %81 = vector.broadcast %cst_43 : f32 to vector<8x128xf32>
    %82 = arith.addf %81, %80 : vector<8x128xf32>
    %83 = arith.divf %81, %82 : vector<8x128xf32>
    %84 = vector.extract_strided_slice %61 {offsets = [0, 256], sizes = [8, 128], strides = [1, 1]} : vector<8x384xf32> to vector<8x128xf32>
    %85 = vector.extract_strided_slice %67 {offsets = [0, 256], sizes = [8, 128], strides = [1, 1]} : vector<8x384xf32> to vector<8x128xf32>
    %86 = arith.mulf %75, %85 : vector<8x128xf32>
    %87 = arith.addf %84, %86 : vector<8x128xf32>
    %88 = math.tanh %87 : vector<8x128xf32>
    %89 = tpu.concatenate %55, %53 in 1 : vector<8x64xf32>, vector<8x64xf32> -> vector<8x128xf32>
    %cst_44 = arith.constant 1.000000e+00 : f32
    %90 = vector.broadcast %cst_44 : f32 to vector<8x128xf32>
    %91 = arith.subf %90, %83 : vector<8x128xf32>
    %92 = arith.mulf %91, %88 : vector<8x128xf32>
    %93 = arith.mulf %83, %89 : vector<8x128xf32>
    %94 = arith.addf %92, %93 : vector<8x128xf32>
    %95 = vector.extract_strided_slice %94 {offsets = [0, 0], sizes = [8, 64], strides = [1, 1]} : vector<8x128xf32> to vector<8x64xf32>
    %c0_45 = arith.constant 0 : index
    %c0_46 = arith.constant 0 : index
    %c0_47 = arith.constant 0 : index
    %96 = vector.load %arg21[%c0_45, %c0_46, %c0_47] : memref<2x8x64xf32, #tpu.memory_space<vmem>>, vector<1x8x64xf32>
    %97 = vector.shape_cast %96 : vector<1x8x64xf32> to vector<8x64xf32>
    %98 = vector.shape_cast %95 : vector<8x64xf32> to vector<1x8x64xf32>
    tpu.vector_store %arg21[%c0_45, %c0_46, %c0_47], %98 {strides = array<i32>} : memref<2x8x64xf32, #tpu.memory_space<vmem>>, vector<1x8x64xf32>,
    %c1_48 = arith.constant 1 : index
    %c0_49 = arith.constant 0 : index
    %c0_50 = arith.constant 0 : index
    %99 = vector.load %arg1[%c1_48, %c0_49, %c0_50] : memref<2x8x64xf32, #tpu.memory_space<vmem>>, vector<1x8x64xf32>
    %100 = vector.shape_cast %99 : vector<1x8x64xf32> to vector<8x64xf32>
    %101 = arith.truncf %94 : vector<8x128xf32> to vector<8x128xbf16>
    %c0_51 = arith.constant 0 : index
    %c0_52 = arith.constant 0 : index
    %102 = vector.load %arg14[%c0_51, %c0_52] : memref<128x384xbf16, #tpu.memory_space<vmem>>, vector<128x384xbf16>
    %cst_53 = arith.constant dense<0.000000e+00> : vector<8x384xf32>
    %103 = tpu.matmul %101, %102, %cst_53 {dimension_numbers = #tpu.dot_dimension_numbers<[1], [0], [0], [1], [0, 0, 1, 1], [], []>} : vector<8x128xbf16>, vector<128x384xbf16>, vector<8x384xf32> -> vector<8x384xf32>
    %c0_54 = arith.constant 0 : index
    %c0_55 = arith.constant 0 : index
    %104 = vector.load %arg16[%c0_54, %c0_55] : memref<1x384xf32, #tpu.memory_space<vmem>>, vector<1x384xf32>
    %105 = vector.broadcast %104 : vector<1x384xf32> to vector<8x384xf32>
    %106 = arith.addf %103, %105 : vector<8x384xf32>
    %107 = arith.truncf %100 : vector<8x64xf32> to vector<8x64xbf16>
    %c0_56 = arith.constant 0 : index
    %c0_57 = arith.constant 0 : index
    %108 = vector.load %arg15[%c0_56, %c0_57] : memref<64x384xbf16, #tpu.memory_space<vmem>>, vector<64x384xbf16>
    %cst_58 = arith.constant dense<0.000000e+00> : vector<8x384xf32>
    %109 = tpu.matmul %107, %108, %cst_58 {dimension_numbers = #tpu.dot_dimension_numbers<[1], [0], [0], [1], [0, 0, 1, 1], [], []>} : vector<8x64xbf16>, vector<64x384xbf16>, vector<8x384xf32> -> vector<8x384xf32>
    %c0_59 = arith.constant 0 : index
    %c0_60 = arith.constant 0 : index
    %110 = vector.load %arg17[%c0_59, %c0_60] : memref<1x384xf32, #tpu.memory_space<vmem>>, vector<1x384xf32>
    %111 = vector.broadcast %110 : vector<1x384xf32> to vector<8x384xf32>
    %112 = arith.addf %109, %111 : vector<8x384xf32>
    %113 = vector.extract_strided_slice %106 {offsets = [0, 0], sizes = [8, 128], strides = [1, 1]} : vector<8x384xf32> to vector<8x128xf32>
    %114 = vector.extract_strided_slice %112 {offsets = [0, 0], sizes = [8, 128], strides = [1, 1]} : vector<8x384xf32> to vector<8x128xf32>
    %115 = arith.addf %113, %114 : vector<8x128xf32>
    %116 = arith.negf %115 : vector<8x128xf32>
    %117 = math.exp %116 : vector<8x128xf32>
    %cst_61 = arith.constant 1.000000e+00 : f32
    %118 = vector.broadcast %cst_61 : f32 to vector<8x128xf32>
    %119 = arith.addf %118, %117 : vector<8x128xf32>
    %120 = arith.divf %118, %119 : vector<8x128xf32>
    %121 = vector.extract_strided_slice %106 {offsets = [0, 128], sizes = [8, 128], strides = [1, 1]} : vector<8x384xf32> to vector<8x128xf32>
    %122 = vector.extract_strided_slice %112 {offsets = [0, 128], sizes = [8, 128], strides = [1, 1]} : vector<8x384xf32> to vector<8x128xf32>
    %123 = arith.addf %121, %122 : vector<8x128xf32>
    %124 = arith.negf %123 : vector<8x128xf32>
    %125 = math.exp %124 : vector<8x128xf32>
    %cst_62 = arith.constant 1.000000e+00 : f32
    %126 = vector.broadcast %cst_62 : f32 to vector<8x128xf32>
    %127 = arith.addf %126, %125 : vector<8x128xf32>
    %128 = arith.divf %126, %127 : vector<8x128xf32>
    %129 = vector.extract_strided_slice %106 {offsets = [0, 256], sizes = [8, 128], strides = [1, 1]} : vector<8x384xf32> to vector<8x128xf32>
    %130 = vector.extract_strided_slice %112 {offsets = [0, 256], sizes = [8, 128], strides = [1, 1]} : vector<8x384xf32> to vector<8x128xf32>
    %131 = arith.mulf %120, %130 : vector<8x128xf32>
    %132 = arith.addf %129, %131 : vector<8x128xf32>
    %133 = math.tanh %132 : vector<8x128xf32>
    %134 = tpu.concatenate %100, %53 in 1 : vector<8x64xf32>, vector<8x64xf32> -> vector<8x128xf32>
    %cst_63 = arith.constant 1.000000e+00 : f32
    %135 = vector.broadcast %cst_63 : f32 to vector<8x128xf32>
    %136 = arith.subf %135, %128 : vector<8x128xf32>
    %137 = arith.mulf %136, %133 : vector<8x128xf32>
    %138 = arith.mulf %128, %134 : vector<8x128xf32>
    %139 = arith.addf %137, %138 : vector<8x128xf32>
    %140 = vector.extract_strided_slice %139 {offsets = [0, 0], sizes = [8, 64], strides = [1, 1]} : vector<8x128xf32> to vector<8x64xf32>
    %c1_64 = arith.constant 1 : index
    %c0_65 = arith.constant 0 : index
    %c0_66 = arith.constant 0 : index
    %141 = vector.load %arg21[%c1_64, %c0_65, %c0_66] : memref<2x8x64xf32, #tpu.memory_space<vmem>>, vector<1x8x64xf32>
    %142 = vector.shape_cast %141 : vector<1x8x64xf32> to vector<8x64xf32>
    %143 = vector.shape_cast %140 : vector<8x64xf32> to vector<1x8x64xf32>
    tpu.vector_store %arg21[%c1_64, %c0_65, %c0_66], %143 {strides = array<i32>} : memref<2x8x64xf32, #tpu.memory_space<vmem>>, vector<1x8x64xf32>,
    %144 = arith.truncf %139 : vector<8x128xf32> to vector<8x128xbf16>
    %c0_67 = arith.constant 0 : index
    %c0_68 = arith.constant 0 : index
    %145 = vector.load %arg18[%c0_67, %c0_68] : memref<128x128xbf16, #tpu.memory_space<vmem>>, vector<128x128xbf16>
    %cst_69 = arith.constant dense<0.000000e+00> : vector<8x128xf32>
    %146 = tpu.matmul %144, %145, %cst_69 {dimension_numbers = #tpu.dot_dimension_numbers<[1], [0], [0], [1], [0, 0, 1, 1], [], []>} : vector<8x128xbf16>, vector<128x128xbf16>, vector<8x128xf32> -> vector<8x128xf32>
    %c0_70 = arith.constant 0 : index
    %c0_71 = arith.constant 0 : index
    %147 = vector.load %arg19[%c0_70, %c0_71] : memref<1x128xf32, #tpu.memory_space<vmem>>, vector<1x128xf32>
    %148 = vector.broadcast %147 : vector<1x128xf32> to vector<8x128xf32>
    %149 = arith.addf %146, %148 : vector<8x128xf32>
    %cst_72 = arith.constant dense<0xFF800000> : vector<8xf32>
    %150 = vector.multi_reduction <maximumf>, %149, %cst_72 [1] : vector<8x128xf32> to vector<8xf32>
    %151 = vector.shape_cast %150 : vector<8xf32> to vector<8x1xf32>
    %152 = vector.broadcast %151 : vector<8x1xf32> to vector<8x128xf32>
    %153 = arith.subf %149, %152 : vector<8x128xf32>
    %154 = math.exp %153 : vector<8x128xf32>
    %cst_73 = arith.constant dense<0.000000e+00> : vector<8xf32>
    %155 = vector.multi_reduction <add>, %154, %cst_73 [1] : vector<8x128xf32> to vector<8xf32>
    %156 = vector.shape_cast %155 : vector<8xf32> to vector<8x1xf32>
    %157 = tpu.reciprocal %156 {approx = true} : vector<8x1xf32> -> vector<8x1xf32>
    %158 = vector.broadcast %157 : vector<8x1xf32> to vector<8x128xf32>
    %159 = arith.mulf %154, %158 : vector<8x128xf32>
    %c0_74 = arith.constant 0 : index
    %c0_75 = arith.constant 0 : index
    %160 = vector.load %arg20[%c0_74, %c0_75] : memref<8x128xf32, #tpu.memory_space<vmem>>, vector<8x128xf32>
    tpu.vector_store %arg20[%c0_74, %c0_75], %159 {strides = array<i32>} : memref<8x128xf32, #tpu.memory_space<vmem>>, vector<8x128xf32>,
    return
  }
}

</mosaic_0001>

<llo_original>
// kernel: recurrent_decoder_forward.1
$region0: #{recurrent_decoder_forward.1}
  #allocation0 [shape = 'u32[]', space=smem, size = 0x4, offset = 0x4, fixed_abs, tag = 'smem constant byte address 0x4 - core index']
  #allocation1 [shape = 'u32[144,128]{1,0:T(1,128)}', space=vmem, size = 0x12000, scoped, tag = 'internal scratch']
  #allocation2 [shape = 'f32[1,1]{1,0:T(1,128)S(6)}', space=smem, size = 0x200, scoped, tag = 'scoped memory for recurrent_decoder_forward.1']
  %s0 = inlined_call_operand.vmem [shape: f32[8,32], index: 0, kind: input, shape index: {}]
  %s1 = inlined_call_operand.hbm [shape: f32[2,8,64], index: 1, kind: input, shape index: {}]
  %s2 = inlined_call_operand.hbm [shape: f32[64,64], index: 2, kind: input, shape index: {}]
  %s3 = inlined_call_operand.hbm [shape: f32[64,64], index: 3, kind: input, shape index: {}]
  %s4 = inlined_call_operand.vmem [shape: bf16[64,32], index: 4, kind: input, shape index: {}]
  %s5 = inlined_call_operand.vmem [shape: f32[1,32], index: 5, kind: input, shape index: {}]
  %s6 = inlined_call_operand.vmem [shape: bf16[64,32], index: 6, kind: input, shape index: {}]
  %s7 = inlined_call_operand.vmem [shape: f32[1,32], index: 7, kind: input, shape index: {}]
  %s8 = inlined_call_operand.hbm [shape: f32[1,32], index: 8, kind: input, shape index: {}]
  %s9 = inlined_call_operand.<no memory space> [shape: f32[1,1], index: 9, kind: input, shape index: {}]
  %s10 = inlined_call_operand.vmem [shape: bf16[160,384], index: 10, kind: input, shape index: {}]
  %s11 = inlined_call_operand.vmem [shape: bf16[64,384], index: 11, kind: input, shape index: {}]
  %s12 = inlined_call_operand.vmem [shape: f32[1,384], index: 12, kind: input, shape index: {}]
  %s13 = inlined_call_operand.vmem [shape: f32[1,384], index: 13, kind: input, shape index: {}]
  %s14 = inlined_call_operand.hbm [shape: bf16[128,384], index: 14, kind: input, shape index: {}]
  %s15 = inlined_call_operand.hbm [shape: bf16[64,384], index: 15, kind: input, shape index: {}]
  %s16 = inlined_call_operand.vmem [shape: f32[1,384], index: 16, kind: input, shape index: {}]
  %s17 = inlined_call_operand.vmem [shape: f32[1,384], index: 17, kind: input, shape index: {}]
  %s18 = inlined_call_operand.hbm [shape: bf16[128,128], index: 18, kind: input, shape index: {}]
  %s19 = inlined_call_operand.hbm [shape: f32[1,128], index: 19, kind: input, shape index: {}]
  %s20 = inlined_call_operand.hbm [shape: f32[8,128], index: 20, kind: output, shape index: {0}]
  %s21 = inlined_call_operand.hbm [shape: f32[2,8,64], index: 21, kind: output, shape index: {1}]
  %s22 = inlined_call_operand.vmem [shape: f32[16,8], index: 22, kind: output, shape index: {2}]
  %s23 = inlined_call_operand.hbm [shape: f32[8,128], index: 23, kind: output, shape index: {3}]
  %24 = xla_tuple %s20, %s21, %s22, %s23
  %s25 = sld [smem:[#allocation0]]
  $region146: #{recurrent_decoder_forward.1} parent=0
    _
  %s27 = ssub.s32 1, %s25
  %s28 = scalar_select 0, %s27, %s25
  %29 = sst [smem:[#allocation2]] %s9
  $region1: #{recurrent_decoder_forward.1} parent=0
    #allocation3 [shape = 'u8[8192]{0}', space=vmem, size = 0x2000, scoped, tag = 'input window, operand 1, single buffered']
    #allocation4 [shape = 's32[1]{0}', space=sflag, size = 0x4, scoped, tag = 'scoped memory for recurrent_decoder_forward.1']
    #allocation5 [shape = 's32[1]{0}', space=sflag, size = 0x4, scoped, tag = 'scoped memory for recurrent_decoder_forward.1']
    #allocation6 [shape = 'u8[32768]{0}', space=vmem, size = 0x8000, scoped, tag = 'input window, operand 2, single buffered']
    #allocation7 [shape = 's32[1]{0}', space=sflag, size = 0x4, scoped, tag = 'scoped memory for recurrent_decoder_forward.1']
    #allocation8 [shape = 'u8[32768]{0}', space=vmem, size = 0x8000, scoped, tag = 'input window, operand 3, single buffered']
    #allocation9 [shape = 'u8[512]{0}', space=vmem, size = 0x400, scoped, tag = 'input window, operand 8, single buffered']
    #allocation10 [shape = 's32[1]{0}', space=sflag, size = 0x4, scoped, tag = 'scoped memory for recurrent_decoder_forward.1']
    #allocation11 [shape = 'u8[98304]{0}', space=vmem, size = 0x18000, scoped, tag = 'input window, operand 14, single buffered']
    #allocation12 [shape = 'u8[49152]{0}', space=vmem, size = 0xc000, scoped, tag = 'input window, operand 15, single buffered']
    #allocation13 [shape = 's32[1]{0}', space=sflag, size = 0x4, scoped, tag = 'scoped memory for recurrent_decoder_forward.1']
    #allocation14 [shape = 'u8[32768]{0}', space=vmem, size = 0x8000, scoped, tag = 'input window, operand 18, single buffered']
    #allocation15 [shape = 'u8[512]{0}', space=vmem, size = 0x400, scoped, tag = 'input window, operand 19, single buffered']
    #allocation16 [shape = 's32[1]{0}', space=sflag, size = 0x4, scoped, tag = 'scoped memory for recurrent_decoder_forward.1']
    #allocation17 [shape = 'u8[4096]{0}', space=vmem, size = 0x1000, scoped, tag = 'output window, operand 0, single buffered']
    #allocation18 [shape = 'u8[8192]{0}', space=vmem, size = 0x2000, scoped, tag = 'output window, operand 1, single buffered']
    #allocation19 [shape = 's32[1]{0}', space=sflag, size = 0x4, scoped, tag = 'scoped memory for recurrent_decoder_forward.1']
    #allocation20 [shape = 'u8[4096]{0}', space=vmem, size = 0x1000, scoped, tag = 'output window, operand 3, single buffered']
    %30 = vsyncpa [#allocation4], 0
    %31 = vsyncpa [#allocation7], 0
    %32 = vsyncpa [#allocation10], 0
    %33 = vsyncpa [#allocation13], 0
    %34 = vsyncpa [#allocation16], 0
    %35 = vsyncpa [#allocation5], 0
    %36 = vsyncpa [#allocation19], 0
    // Predicated region
    $region2: #{recurrent_decoder_forward.1} parent=1 // pred_check
      _
    $region3: #{recurrent_decoder_forward.1} parent=1 // pred_check_branch
      %38 = sbr.rel (0) target = $region5
    $region4: #{recurrent_decoder_forward.1} parent=1 // pred_region
      _
    $region5: #{recurrent_decoder_forward.1} parent=1 // pred_fallthru
      _
    // Predicated region
    $region6: #{recurrent_decoder_forward.1} parent=1 // pred_check
      _
    $region7: #{recurrent_decoder_forward.1} parent=1 // pred_check_branch
      %40 = sbr.rel (0) target = $region9
    $region8: #{recurrent_decoder_forward.1} parent=1 // pred_region
      %s42 = ssub.s32 256, 256
      %43 = vsyncadd [#allocation4], %s42
      %s44 = sshll.u32 [#allocation3], 4
      %s45 = int_to_ptr.vmem [resolvable:$true] %s44
      %50 = dma.hbm_to_vmem [thread:$0]  %s1, 256, %s45, [#allocation4], 128, 128, 8
    $region9: #{recurrent_decoder_forward.1} parent=1 // pred_fallthru
      _
    // Predicated region
    $region10: #{recurrent_decoder_forward.1} parent=1 // pred_check
      _
    $region11: #{recurrent_decoder_forward.1} parent=1 // pred_check_branch
      %52 = sbr.rel (0) target = $region13
    $region12: #{recurrent_decoder_forward.1} parent=1 // pred_region
      %s54 = ssub.s32 1024, 1024
      %55 = vsyncadd [#allocation7], %s54
      %s56 = sshll.u32 [#allocation6], 4
      %s57 = int_to_ptr.vmem [resolvable:$true] %s56
      %62 = dma.hbm_to_vmem [thread:$0]  %s2, 1024, %s57, [#allocation7], 128, 128, 8
    $region13: #{recurrent_decoder_forward.1} parent=1 // pred_fallthru
      _
    // Predicated region
    $region14: #{recurrent_decoder_forward.1} parent=1 // pred_check
      _
    $region15: #{recurrent_decoder_forward.1} parent=1 // pred_check_branch
      %64 = sbr.rel (0) target = $region17
    $region16: #{recurrent_decoder_forward.1} parent=1 // pred_region
      %s66 = ssub.s32 1024, 1024
      %67 = vsyncadd [#allocation7], %s66
      %s68 = sshll.u32 [#allocation8], 4
      %s69 = int_to_ptr.vmem [resolvable:$true] %s68
      %74 = dma.hbm_to_vmem [thread:$0]  %s3, 1024, %s69, [#allocation7], 128, 128, 8
    $region17: #{recurrent_decoder_forward.1} parent=1 // pred_fallthru
      _
    // Predicated region
    $region18: #{recurrent_decoder_forward.1} parent=1 // pred_check
      _
    $region19: #{recurrent_decoder_forward.1} parent=1 // pred_check_branch
      %76 = sbr.rel (0) target = $region21
    $region20: #{recurrent_decoder_forward.1} parent=1 // pred_region
      _
    $region21: #{recurrent_decoder_forward.1} parent=1 // pred_fallthru
      _
    // Predicated region
    $region22: #{recurrent_decoder_forward.1} parent=1 // pred_check
      _
    $region23: #{recurrent_decoder_forward.1} parent=1 // pred_check_branch
      %78 = sbr.rel (0) target = $region25
    $region24: #{recurrent_decoder_forward.1} parent=1 // pred_region
      _
    $region25: #{recurrent_decoder_forward.1} parent=1 // pred_fallthru
      _
    // Predicated region
    $region26: #{recurrent_decoder_forward.1} parent=1 // pred_check
      _
    $region27: #{recurrent_decoder_forward.1} parent=1 // pred_check_branch
      %80 = sbr.rel (0) target = $region29
    $region28: #{recurrent_decoder_forward.1} parent=1 // pred_region
      _
    $region29: #{recurrent_decoder_forward.1} parent=1 // pred_fallthru
      _
    // Predicated region
    $region30: #{recurrent_decoder_forward.1} parent=1 // pred_check
      _
    $region31: #{recurrent_decoder_forward.1} parent=1 // pred_check_branch
      %82 = sbr.rel (0) target = $region33
    $region32: #{recurrent_decoder_forward.1} parent=1 // pred_region
      _
    $region33: #{recurrent_decoder_forward.1} parent=1 // pred_fallthru
      _
    // Predicated region
    $region34: #{recurrent_decoder_forward.1} parent=1 // pred_check
      _
    $region35: #{recurrent_decoder_forward.1} parent=1 // pred_check_branch
      %84 = sbr.rel (0) target = $region37
    $region36: #{recurrent_decoder_forward.1} parent=1 // pred_region
      %s86 = ssub.s32 16, 16
      %87 = vsyncadd [#allocation10], %s86
      %s89 = sshll.u32 [#allocation9], 4
      %s90 = int_to_ptr.vmem [resolvable:$true] %s89
      %92 = dma.hbm_to_vmem [thread:$0]  %s8, 16, %s90, [#allocation10]
    $region37: #{recurrent_decoder_forward.1} parent=1 // pred_fallthru
      _
    // Predicated region
    $region38: #{recurrent_decoder_forward.1} parent=1 // pred_check
      _
    $region39: #{recurrent_decoder_forward.1} parent=1 // pred_check_branch
      %94 = sbr.rel (0) target = $region41
    $region40: #{recurrent_decoder_forward.1} parent=1 // pred_region
      _
    $region41: #{recurrent_decoder_forward.1} parent=1 // pred_fallthru
      _
    // Predicated region
    $region42: #{recurrent_decoder_forward.1} parent=1 // pred_check
      _
    $region43: #{recurrent_decoder_forward.1} parent=1 // pred_check_branch
      %96 = sbr.rel (0) target = $region45
    $region44: #{recurrent_decoder_forward.1} parent=1 // pred_region
      _
    $region45: #{recurrent_decoder_forward.1} parent=1 // pred_fallthru
      _
    // Predicated region
    $region46: #{recurrent_decoder_forward.1} parent=1 // pred_check
      _
    $region47: #{recurrent_decoder_forward.1} parent=1 // pred_check_branch
      %98 = sbr.rel (0) target = $region49
    $region48: #{recurrent_decoder_forward.1} parent=1 // pred_region
      _
    $region49: #{recurrent_decoder_forward.1} parent=1 // pred_fallthru
      _
    // Predicated region
    $region50: #{recurrent_decoder_forward.1} parent=1 // pred_check
      _
    $region51: #{recurrent_decoder_forward.1} parent=1 // pred_check_branch
      %100 = sbr.rel (0) target = $region53
    $region52: #{recurrent_decoder_forward.1} parent=1 // pred_region
      _
    $region53: #{recurrent_decoder_forward.1} parent=1 // pred_fallthru
      _
    // Predicated region
    $region54: #{recurrent_decoder_forward.1} parent=1 // pred_check
      _
    $region55: #{recurrent_decoder_forward.1} parent=1 // pred_check_branch
      %102 = sbr.rel (0) target = $region57
    $region56: #{recurrent_decoder_forward.1} parent=1 // pred_region
      _
    $region57: #{recurrent_decoder_forward.1} parent=1 // pred_fallthru
      _
    // Predicated region
    $region58: #{recurrent_decoder_forward.1} parent=1 // pred_check
      _
    $region59: #{recurrent_decoder_forward.1} parent=1 // pred_check_branch
      %104 = sbr.rel (0) target = $region61
    $region60: #{recurrent_decoder_forward.1} parent=1 // pred_region
      %s106 = ssub.s32 3072, 3072
      %107 = vsyncadd [#allocation10], %s106
      %s108 = sshll.u32 [#allocation11], 4
      %s109 = int_to_ptr.vmem [resolvable:$true] %s108
      %114 = dma.hbm_to_vmem [thread:$0]  %s14, 3072, %s109, [#allocation10], 192, 192, 12
    $region61: #{recurrent_decoder_forward.1} parent=1 // pred_fallthru
      _
    // Predicated region
    $region62: #{recurrent_decoder_forward.1} parent=1 // pred_check
      _
    $region63: #{recurrent_decoder_forward.1} parent=1 // pred_check_branch
      %116 = sbr.rel (0) target = $region65
    $region64: #{recurrent_decoder_forward.1} parent=1 // pred_region
      %s118 = ssub.s32 1536, 1536
      %119 = vsyncadd [#allocation13], %s118
      %s120 = sshll.u32 [#allocation12], 4
      %s121 = int_to_ptr.vmem [resolvable:$true] %s120
      %126 = dma.hbm_to_vmem [thread:$0]  %s15, 1536, %s121, [#allocation13], 192, 192, 12
    $region65: #{recurrent_decoder_forward.1} parent=1 // pred_fallthru
      _
    // Predicated region
    $region66: #{recurrent_decoder_forward.1} parent=1 // pred_check
      _
    $region67: #{recurrent_decoder_forward.1} parent=1 // pred_check_branch
      %128 = sbr.rel (0) target = $region69
    $region68: #{recurrent_decoder_forward.1} parent=1 // pred_region
      _
    $region69: #{recurrent_decoder_forward.1} parent=1 // pred_fallthru
      _
    // Predicated region
    $region70: #{recurrent_decoder_forward.1} parent=1 // pred_check
      _
    $region71: #{recurrent_decoder_forward.1} parent=1 // pred_check_branch
      %130 = sbr.rel (0) target = $region73
    $region72: #{recurrent_decoder_forward.1} parent=1 // pred_region
      _
    $region73: #{recurrent_decoder_forward.1} parent=1 // pred_fallthru
      _
    // Predicated region
    $region74: #{recurrent_decoder_forward.1} parent=1 // pred_check
      _
    $region75: #{recurrent_decoder_forward.1} parent=1 // pred_check_branch
      %132 = sbr.rel (0) target = $region77
    $region76: #{recurrent_decoder_forward.1} parent=1 // pred_region
      %s134 = ssub.s32 1024, 1024
      %135 = vsyncadd [#allocation13], %s134
      %s136 = sshll.u32 [#allocation14], 4
      %s137 = int_to_ptr.vmem [resolvable:$true] %s136
      %142 = dma.hbm_to_vmem [thread:$0]  %s18, 1024, %s137, [#allocation13], 64, 64, 4
    $region77: #{recurrent_decoder_forward.1} parent=1 // pred_fallthru
      _
    // Predicated region
    $region78: #{recurrent_decoder_forward.1} parent=1 // pred_check
      _
    $region79: #{recurrent_decoder_forward.1} parent=1 // pred_check_branch
      %144 = sbr.rel (0) target = $region81
    $region80: #{recurrent_decoder_forward.1} parent=1 // pred_region
      %s146 = ssub.s32 16, 16
      %147 = vsyncadd [#allocation16], %s146
      %s149 = sshll.u32 [#allocation15], 4
      %s150 = int_to_ptr.vmem [resolvable:$true] %s149
      %152 = dma.hbm_to_vmem [thread:$0]  %s19, 16, %s150, [#allocation16]
    $region81: #{recurrent_decoder_forward.1} parent=1 // pred_fallthru
      _
    // Predicated region
    $region82: #{recurrent_decoder_forward.1} parent=1 // pred_check
      _
    $region83: #{recurrent_decoder_forward.1} parent=1 // pred_check_branch
      %154 = sbr.rel (0) target = $region85
    $region84: #{recurrent_decoder_forward.1} parent=1 // pred_region
      %155 = dma.done [#allocation4], 256
    $region85: #{recurrent_decoder_forward.1} parent=1 // pred_fallthru
      _
    // Predicated region
    $region86: #{recurrent_decoder_forward.1} parent=1 // pred_check
      _
    $region87: #{recurrent_decoder_forward.1} parent=1 // pred_check_branch
      %157 = sbr.rel (0) target = $region89
    $region88: #{recurrent_decoder_forward.1} parent=1 // pred_region
      %158 = dma.done [#allocation7], 1024
    $region89: #{recurrent_decoder_forward.1} parent=1 // pred_fallthru
      _
    // Predicated region
    $region90: #{recurrent_decoder_forward.1} parent=1 // pred_check
      _
    $region91: #{recurrent_decoder_forward.1} parent=1 // pred_check_branch
      %160 = sbr.rel (0) target = $region93
    $region92: #{recurrent_decoder_forward.1} parent=1 // pred_region
      %161 = dma.done [#allocation7], 1024
    $region93: #{recurrent_decoder_forward.1} parent=1 // pred_fallthru
      _
    // Predicated region
    $region94: #{recurrent_decoder_forward.1} parent=1 // pred_check
      _
    $region95: #{recurrent_decoder_forward.1} parent=1 // pred_check_branch
      %163 = sbr.rel (0) target = $region97
    $region96: #{recurrent_decoder_forward.1} parent=1 // pred_region
      %164 = dma.done [#allocation10], 16
    $region97: #{recurrent_decoder_forward.1} parent=1 // pred_fallthru
      _
    // Predicated region
    $region98: #{recurrent_decoder_forward.1} parent=1 // pred_check
      _
    $region99: #{recurrent_decoder_forward.1} parent=1 // pred_check_branch
      %166 = sbr.rel (0) target = $region101
    $region100: #{recurrent_decoder_forward.1} parent=1 // pred_region
      %167 = dma.done [#allocation10], 3072
    $region101: #{recurrent_decoder_forward.1} parent=1 // pred_fallthru
      _
    // Predicated region
    $region102: #{recurrent_decoder_forward.1} parent=1 // pred_check
      _
    $region103: #{recurrent_decoder_forward.1} parent=1 // pred_check_branch
      %169 = sbr.rel (0) target = $region105
    $region104: #{recurrent_decoder_forward.1} parent=1 // pred_region
      %170 = dma.done [#allocation13], 1536
    $region105: #{recurrent_decoder_forward.1} parent=1 // pred_fallthru
      _
    // Predicated region
    $region106: #{recurrent_decoder_forward.1} parent=1 // pred_check
      _
    $region107: #{recurrent_decoder_forward.1} parent=1 // pred_check_branch
      %172 = sbr.rel (0) target = $region109
    $region108: #{recurrent_decoder_forward.1} parent=1 // pred_region
      %173 = dma.done [#allocation13], 1024
    $region109: #{recurrent_decoder_forward.1} parent=1 // pred_fallthru
      _
    // Predicated region
    $region110: #{recurrent_decoder_forward.1} parent=1 // pred_check
      _
    $region111: #{recurrent_decoder_forward.1} parent=1 // pred_check_branch
      %175 = sbr.rel (0) target = $region113
    $region112: #{recurrent_decoder_forward.1} parent=1 // pred_region
      %176 = dma.done [#allocation16], 16
    $region113: #{recurrent_decoder_forward.1} parent=1 // pred_fallthru
      _
    %s178 = scalar_lea.vmem [#allocation3], 8
    %v179 = vld [vmem:[%s178] sm:$0xff]
    %v180 = vld [vmem:[#allocation6] sm:$0xff]
    %v181 = vld [vmem:[#allocation6 + $0x8] sm:$0xff]
    %v182 = vld [vmem:[#allocation6 + $0x10] sm:$0xff]
    %v183 = vld [vmem:[#allocation6 + $0x18] sm:$0xff]
    %v184 = vld [vmem:[#allocation6 + $0x20] sm:$0xff]
    %v185 = vld [vmem:[#allocation6 + $0x28] sm:$0xff]
    %v186 = vld [vmem:[#allocation6 + $0x30] sm:$0xff]
    %v187 = vld [vmem:[#allocation6 + $0x38] sm:$0xff]
    %v188 = vld [vmem:[#allocation8] sm:$0xff]
    %v189 = vld [vmem:[#allocation8 + $0x8] sm:$0xff]
    %v190 = vld [vmem:[#allocation8 + $0x10] sm:$0xff]
    %v191 = vld [vmem:[#allocation8 + $0x18] sm:$0xff]
    %v192 = vld [vmem:[#allocation8 + $0x20] sm:$0xff]
    %v193 = vld [vmem:[#allocation8 + $0x28] sm:$0xff]
    %v194 = vld [vmem:[#allocation8 + $0x30] sm:$0xff]
    %v195 = vld [vmem:[#allocation8 + $0x38] sm:$0xff]
    %v196 = vpack.c.bf16 %v179, %v179
    %v197 = vld [vmem:[%s4] sm:$0xf]
    %v198 = vld [vmem:[%s4 + $0x4] sm:$0xf]
    %v199 = vld [vmem:[%s4 + $0x8] sm:$0xf]
    %v200 = vld [vmem:[%s4 + $0xc] sm:$0xf]
    %v201 = vld [vmem:[%s4 + $0x10] sm:$0xf]
    %v202 = vld [vmem:[%s4 + $0x14] sm:$0xf]
    %v203 = vld [vmem:[%s4 + $0x18] sm:$0xf]
    %v204 = vld [vmem:[%s4 + $0x1c] sm:$0xf]
    %v205 = vld [vmem:[%s5] sm:$0x1]
    %v207 = vlaneseq
    %v208 = vshrl.u32 %v207, 7
    %v209 = vsub.s32 0, %v208
    %v210 = vrot.slane %v205, %v209
    %v220 = vunpack.c.l.b16 %v197
    %v221 = vunpack.c.l.b16 %v198
    %v222 = vunpack.c.l.b16 %v199
    %v223 = vunpack.c.l.b16 %v200
    %v224 = vunpack.c.l.b16 %v201
    %v225 = vunpack.c.l.b16 %v202
    %v226 = vunpack.c.l.b16 %v203
    %v227 = vunpack.c.l.b16 %v204
    %v228 = vpack.c.b16 %v221, %v220
    %v229 = vpack.c.b16 %v223, %v222
    %v230 = vpack.c.b16 %v225, %v224
    %v231 = vpack.c.b16 %v227, %v226
    %vm236 = vcmask 523264
    %v238 = vsel %vm236, %v196, 0
    %240 = vmatprep.subr.bf16.mxu0 0
    %241 = vmatpush1.bf16.msra.mxu0 0
    %242 = vmatprep.subr.bf16.mxu0 0
    %243 = vmatpush1.bf16.msra.mxu0 0
    %244 = vmatprep.subr.bf16.mxu0 0
    %245 = vmatpush1.bf16.msra.mxu0 0
    %246 = vmatprep.subr.bf16.mxu0 0
    %247 = vmatpush1.bf16.msra.mxu0 0
    %248 = vmatprep.subr.bf16.mxu0 0
    %249 = vmatpush1.bf16.msra.mxu0 %v231
    %250 = vmatprep.subr.bf16.mxu0 0
    %251 = vmatpush1.bf16.msra.mxu0 %v230
    %252 = vmatprep.subr.bf16.mxu0 0
    %253 = vmatpush1.bf16.msra.mxu0 %v229
    %254 = vmatprep.subr.bf16.mxu0 0
    %255 = vmatpush1.bf16.msra.mxu0 %v228
    %256 = vmatprep.subr.bf16.mxu0 0
    %257 = vmatpush2.bf16.msra.mxu0 0
    %258 = vmatprep.subr.bf16.mxu0 0
    %259 = vmatpush2.bf16.msra.mxu0 0
    %260 = vmatprep.subr.bf16.mxu0 0
    %261 = vmatpush2.bf16.msra.mxu0 0
    %262 = vmatprep.subr.bf16.mxu0 0
    %263 = vmatpush2.bf16.msra.mxu0 0
    %264 = vmatprep.subr.bf16.mxu0 0
    %265 = vmatpush2.bf16.msra.mxu0 0
    %266 = vmatprep.subr.bf16.mxu0 0
    %267 = vmatpush2.bf16.msra.mxu0 0
    %268 = vmatprep.subr.bf16.mxu0 0
    %269 = vmatpush2.bf16.msra.mxu0 0
    %270 = vmatprep.subr.bf16.mxu0 0
    %271 = vmatpush2.bf16.msra.mxu0 0
    %272 = vmatprep.mubr.bf16.mxu0 0
    %273 = vmatmul.mubr.bf16.gmra.mxu0 %v238
    %v274 = vpop.f32.mrf.mxu0
    %v275 = vadd.f32 %v210, %v274
    %v276 = vpop.f32.mrf.mxu0
    %v277 = vpop.f32.mrf.mxu0
    %v278 = vpop.f32.mrf.mxu0
    %279 = vdwg.mxu0
    %v280 = vpack.c.bf16 %v181, %v180
    %v281 = vpack.c.bf16 %v183, %v182
    %v282 = vpack.c.bf16 %v185, %v184
    %v283 = vpack.c.bf16 %v187, %v186
    %v284 = vpack.c.bf16 %v189, %v188
    %v285 = vpack.c.bf16 %v191, %v190
    %v286 = vpack.c.bf16 %v193, %v192
    %v287 = vpack.c.bf16 %v195, %v194
    %v288 = vld [vmem:[%s6] sm:$0xf]
    %v289 = vld [vmem:[%s6 + $0x4] sm:$0xf]
    %v290 = vld [vmem:[%s6 + $0x8] sm:$0xf]
    %v291 = vld [vmem:[%s6 + $0xc] sm:$0xf]
    %v292 = vld [vmem:[%s6 + $0x10] sm:$0xf]
    %v293 = vld [vmem:[%s6 + $0x14] sm:$0xf]
    %v294 = vld [vmem:[%s6 + $0x18] sm:$0xf]
    %v295 = vld [vmem:[%s6 + $0x1c] sm:$0xf]
    %v296 = vld [vmem:[%s7] sm:$0x1]
    %v298 = vlaneseq
    %v299 = vshrl.u32 %v298, 7
    %v300 = vsub.s32 0, %v299
    %v301 = vrot.slane %v296, %v300
    %v311 = vunpack.c.l.b16 %v288
    %v312 = vunpack.c.l.b16 %v289
    %v313 = vunpack.c.l.b16 %v290
    %v314 = vunpack.c.l.b16 %v291
    %v315 = vunpack.c.l.b16 %v292
    %v316 = vunpack.c.l.b16 %v293
    %v317 = vunpack.c.l.b16 %v294
    %v318 = vunpack.c.l.b16 %v295
    %v319 = vpack.c.b16 %v312, %v311
    %v320 = vpack.c.b16 %v314, %v313
    %v321 = vpack.c.b16 %v316, %v315
    %v322 = vpack.c.b16 %v318, %v317
    %v328 = vsel %vm236, %v280, 0
    %v331 = vsel %vm236, %v281, 0
    %v334 = vsel %vm236, %v282, 0
    %v337 = vsel %vm236, %v283, 0
    %v340 = vsel %vm236, %v284, 0
    %v343 = vsel %vm236, %v285, 0
    %v346 = vsel %vm236, %v286, 0
    %v349 = vsel %vm236, %v287, 0
    %351 = vmatprep.subr.bf16.mxu0 0
    %352 = vmatpush1.bf16.msra.mxu0 0
    %353 = vmatprep.subr.bf16.mxu0 0
    %354 = vmatpush1.bf16.msra.mxu0 0
    %355 = vmatprep.subr.bf16.mxu0 0
    %356 = vmatpush1.bf16.msra.mxu0 0
    %357 = vmatprep.subr.bf16.mxu0 0
    %358 = vmatpush1.bf16.msra.mxu0 0
    %359 = vmatprep.subr.bf16.mxu0 0
    %360 = vmatpush1.bf16.msra.mxu0 %v322
    %361 = vmatprep.subr.bf16.mxu0 0
    %362 = vmatpush1.bf16.msra.mxu0 %v321
    %363 = vmatprep.subr.bf16.mxu0 0
    %364 = vmatpush1.bf16.msra.mxu0 %v320
    %365 = vmatprep.subr.bf16.mxu0 0
    %366 = vmatpush1.bf16.msra.mxu0 %v319
    %367 = vmatprep.subr.bf16.mxu0 0
    %368 = vmatpush2.bf16.msra.mxu0 0
    %369 = vmatprep.subr.bf16.mxu0 0
    %370 = vmatpush2.bf16.msra.mxu0 0
    %371 = vmatprep.subr.bf16.mxu0 0
    %372 = vmatpush2.bf16.msra.mxu0 0
    %373 = vmatprep.subr.bf16.mxu0 0
    %374 = vmatpush2.bf16.msra.mxu0 0
    %375 = vmatprep.subr.bf16.mxu0 0
    %376 = vmatpush2.bf16.msra.mxu0 0
    %377 = vmatprep.subr.bf16.mxu0 0
    %378 = vmatpush2.bf16.msra.mxu0 0
    %379 = vmatprep.subr.bf16.mxu0 0
    %380 = vmatpush2.bf16.msra.mxu0 0
    %381 = vmatprep.subr.bf16.mxu0 0
    %382 = vmatpush2.bf16.msra.mxu0 0
    %383 = vmatprep.mubr.bf16.mxu0 0
    %384 = vmatmul.mubr.bf16.gmra.mxu0 %v328
    %v385 = vpop.f32.mrf.mxu0
    %v386 = vadd.f32 %v301, %v385
    %v387 = vpop.f32.mrf.mxu0
    %v388 = vpop.f32.mrf.mxu0
    %v389 = vadd.f32 %v301, %v388
    %v390 = vpop.f32.mrf.mxu0
    %391 = vmatprep.mubr.bf16.mxu0 0
    %392 = vmatmul.mubr.bf16.gmra.mxu0 %v331
    %v393 = vpop.f32.mrf.mxu0
    %v394 = vadd.f32 %v301, %v393
    %v395 = vpop.f32.mrf.mxu0
    %v396 = vpop.f32.mrf.mxu0
    %v397 = vadd.f32 %v301, %v396
    %v398 = vpop.f32.mrf.mxu0
    %399 = vmatprep.mubr.bf16.mxu0 0
    %400 = vmatmul.mubr.bf16.gmra.mxu0 %v334
    %v401 = vpop.f32.mrf.mxu0
    %v402 = vadd.f32 %v301, %v401
    %v403 = vpop.f32.mrf.mxu0
    %v404 = vpop.f32.mrf.mxu0
    %v405 = vadd.f32 %v301, %v404
    %v406 = vpop.f32.mrf.mxu0
    %407 = vmatprep.mubr.bf16.mxu0 0
    %408 = vmatmul.mubr.bf16.gmra.mxu0 %v337
    %v409 = vpop.f32.mrf.mxu0
    %v410 = vadd.f32 %v301, %v409
    %v411 = vpop.f32.mrf.mxu0
    %v412 = vpop.f32.mrf.mxu0
    %v413 = vadd.f32 %v301, %v412
    %v414 = vpop.f32.mrf.mxu0
    %415 = vmatprep.mubr.bf16.mxu0 0
    %416 = vmatmul.mubr.bf16.gmra.mxu0 %v340
    %v417 = vpop.f32.mrf.mxu0
    %v418 = vadd.f32 %v301, %v417
    %v419 = vpop.f32.mrf.mxu0
    %v420 = vpop.f32.mrf.mxu0
    %v421 = vadd.f32 %v301, %v420
    %v422 = vpop.f32.mrf.mxu0
    %423 = vmatprep.mubr.bf16.mxu0 0
    %424 = vmatmul.mubr.bf16.gmra.mxu0 %v343
    %v425 = vpop.f32.mrf.mxu0
    %v426 = vadd.f32 %v301, %v425
    %v427 = vpop.f32.mrf.mxu0
    %v428 = vpop.f32.mrf.mxu0
    %v429 = vadd.f32 %v301, %v428
    %v430 = vpop.f32.mrf.mxu0
    %431 = vmatprep.mubr.bf16.mxu0 0
    %432 = vmatmul.mubr.bf16.gmra.mxu0 %v346
    %v433 = vpop.f32.mrf.mxu0
    %v434 = vadd.f32 %v301, %v433
    %v435 = vpop.f32.mrf.mxu0
    %v436 = vpop.f32.mrf.mxu0
    %v437 = vadd.f32 %v301, %v436
    %v438 = vpop.f32.mrf.mxu0
    %439 = vmatprep.mubr.bf16.mxu0 0
    %440 = vmatmul.mubr.bf16.gmra.mxu0 %v349
    %v441 = vpop.f32.mrf.mxu0
    %v442 = vadd.f32 %v301, %v441
    %v443 = vpop.f32.mrf.mxu0
    %v444 = vpop.f32.mrf.mxu0
    %v445 = vadd.f32 %v301, %v444
    %v446 = vpop.f32.mrf.mxu0
    %447 = vdwg.mxu0
    %v449 = vcombine.high %v275, %v275
    %v451 = vunpack.c.l.s4 1966171168
    %v452 = vunpack.c.0.s8 %v451
    %v453 = vlaneseq
    %v454 = vshrl.u32 %v453, 7
    %v455 = vsub.s32 %v452, %v454
    %v456 = vrot.slane %v275, %v455
    %v458 = vunpack.c.l.s4 1966171168
    %v459 = vunpack.c.0.s8 %v458
    %v460 = vlaneseq
    %v461 = vshrl.u32 %v460, 7
    %v462 = vsub.s32 %v459, %v461
    %v463 = vrot.slane %v449, %v462
    %v464 = vcombine.high %v456, %v456
    %v465 = vcombine.high %v463, %v463
    %v467 = vunpack.c.l.s4 1966171168
    %v468 = vunpack.c.0.s8 %v467
    %v469 = vlaneseq
    %v470 = vshrl.u32 %v469, 7
    %v471 = vsub.s32 %v468, %v470
    %v472 = vrot.slane %v456, %v471
    %v474 = vunpack.c.l.s4 1966171168
    %v475 = vunpack.c.0.s8 %v474
    %v476 = vlaneseq
    %v477 = vshrl.u32 %v476, 7
    %v478 = vsub.s32 %v475, %v477
    %v479 = vrot.slane %v463, %v478
    %v481 = vunpack.c.l.s4 1966171168
    %v482 = vunpack.c.0.s8 %v481
    %v483 = vlaneseq
    %v484 = vshrl.u32 %v483, 7
    %v485 = vsub.s32 %v482, %v484
    %v486 = vrot.slane %v464, %v485
    %v488 = vunpack.c.l.s4 1966171168
    %v489 = vunpack.c.0.s8 %v488
    %v490 = vlaneseq
    %v491 = vshrl.u32 %v490, 7
    %v492 = vsub.s32 %v489, %v491
    %v493 = vrot.slane %v465, %v492
    %v494 = vcombine.high %v472, %v472
    %v495 = vcombine.high %v479, %v479
    %v496 = vcombine.high %v486, %v486
    %v497 = vcombine.high %v493, %v493
    %v498 = vlaneseq
    %v499 = vshrl.u32 %v498, 7
    %v500 = vsub.s32 0, %v499
    %v501 = vrot.slane %v472, %v500
    %v502 = vlaneseq
    %v503 = vshrl.u32 %v502, 7
    %v504 = vsub.s32 0, %v503
    %v505 = vrot.slane %v486, %v504
    %v506 = vlaneseq
    %v507 = vshrl.u32 %v506, 7
    %v508 = vsub.s32 0, %v507
    %v509 = vrot.slane %v494, %v508
    %v510 = vlaneseq
    %v511 = vshrl.u32 %v510, 7
    %v512 = vsub.s32 0, %v511
    %v513 = vrot.slane %v496, %v512
    %v514 = vlaneseq
    %v515 = vshrl.u32 %v514, 7
    %v516 = vsub.s32 0, %v515
    %v517 = vrot.slane %v479, %v516
    %v518 = vlaneseq
    %v519 = vshrl.u32 %v518, 7
    %v520 = vsub.s32 0, %v519
    %v521 = vrot.slane %v493, %v520
    %v522 = vlaneseq
    %v523 = vshrl.u32 %v522, 7
    %v524 = vsub.s32 0, %v523
    %v525 = vrot.slane %v495, %v524
    %v526 = vlaneseq
    %v527 = vshrl.u32 %v526, 7
    %v528 = vsub.s32 0, %v527
    %v529 = vrot.slane %v497, %v528
    %v538 = vadd.f32 %v501, %v386
    %v539 = vadd.f32 %v505, %v389
    %v540 = vadd.f32 %v509, %v394
    %v541 = vadd.f32 %v513, %v397
    %v542 = vadd.f32 %v517, %v402
    %v543 = vadd.f32 %v521, %v405
    %v544 = vadd.f32 %v525, %v410
    %v545 = vadd.f32 %v529, %v413
    %v546 = vadd.f32 %v501, %v418
    %v547 = vadd.f32 %v505, %v421
    %v548 = vadd.f32 %v509, %v426
    %v549 = vadd.f32 %v513, %v429
    %v550 = vadd.f32 %v517, %v434
    %v551 = vadd.f32 %v521, %v437
    %v552 = vadd.f32 %v525, %v442
    %v553 = vadd.f32 %v529, %v445
    %v554 = vtanh.pop %v538
    %v555 = vtanh.pop %v539
    %v556 = vtanh.pop %v540
    %v557 = vtanh.pop %v541
    %v558 = vtanh.pop %v542
    %v559 = vtanh.pop %v543
    %v560 = vtanh.pop %v544
    %v561 = vtanh.pop %v545
    %v562 = vtanh.pop %v546
    %v563 = vtanh.pop %v547
    %v564 = vtanh.pop %v548
    %v565 = vtanh.pop %v549
    %v566 = vtanh.pop %v550
    %v567 = vtanh.pop %v551
    %v568 = vtanh.pop %v552
    %v569 = vtanh.pop %v553
    %v570 = vld [vmem:[#allocation9] sm:$0x1]
    %v572 = vlaneseq
    %v573 = vshrl.u32 %v572, 7
    %v574 = vsub.s32 0, %v573
    %v575 = vrot.slane %v570, %v574
    %v577 = vmul.f32 %v554, %v575
    %v578 = vmul.f32 %v555, %v575
    %v579 = vmul.f32 %v556, %v575
    %v580 = vmul.f32 %v557, %v575
    %v581 = vmul.f32 %v558, %v575
    %v582 = vmul.f32 %v559, %v575
    %v583 = vmul.f32 %v560, %v575
    %v584 = vmul.f32 %v561, %v575
    %v585 = vmul.f32 %v562, %v575
    %v586 = vmul.f32 %v563, %v575
    %v587 = vmul.f32 %v564, %v575
    %v588 = vmul.f32 %v565, %v575
    %v589 = vmul.f32 %v566, %v575
    %v590 = vmul.f32 %v567, %v575
    %v591 = vmul.f32 %v568, %v575
    %v592 = vmul.f32 %v569, %v575
    %vm593 = vcmask 261120
    %v594 = vsel %vm593, %v577, 0.0
    %595 = vadd.xlane.f32.xlu0 %v594
    %v596 = vpop.xlane.xlu0 %595
    %v597 = vsel %vm593, %v578, 0.0
    %598 = vadd.xlane.f32.xlu0 %v597
    %v599 = vpop.xlane.xlu0 %598
    %v600 = vsel %vm593, %v579, 0.0
    %601 = vadd.xlane.f32.xlu0 %v600
    %v602 = vpop.xlane.xlu0 %601
    %v603 = vsel %vm593, %v580, 0.0
    %604 = vadd.xlane.f32.xlu0 %v603
    %v605 = vpop.xlane.xlu0 %604
    %v606 = vsel %vm593, %v581, 0.0
    %607 = vadd.xlane.f32.xlu0 %v606
    %v608 = vpop.xlane.xlu0 %607
    %v609 = vsel %vm593, %v582, 0.0
    %610 = vadd.xlane.f32.xlu0 %v609
    %v611 = vpop.xlane.xlu0 %610
    %v612 = vsel %vm593, %v583, 0.0
    %613 = vadd.xlane.f32.xlu0 %v612
    %v614 = vpop.xlane.xlu0 %613
    %v615 = vsel %vm593, %v584, 0.0
    %616 = vadd.xlane.f32.xlu0 %v615
    %v617 = vpop.xlane.xlu0 %616
    %v618 = vsel %vm593, %v585, 0.0
    %619 = vadd.xlane.f32.xlu0 %v618
    %v620 = vpop.xlane.xlu0 %619
    %v621 = vsel %vm593, %v586, 0.0
    %622 = vadd.xlane.f32.xlu0 %v621
    %v623 = vpop.xlane.xlu0 %622
    %v624 = vsel %vm593, %v587, 0.0
    %625 = vadd.xlane.f32.xlu0 %v624
    %v626 = vpop.xlane.xlu0 %625
    %v627 = vsel %vm593, %v588, 0.0
    %628 = vadd.xlane.f32.xlu0 %v627
    %v629 = vpop.xlane.xlu0 %628
    %v630 = vsel %vm593, %v589, 0.0
    %631 = vadd.xlane.f32.xlu0 %v630
    %v632 = vpop.xlane.xlu0 %631
    %v633 = vsel %vm593, %v590, 0.0
    %634 = vadd.xlane.f32.xlu0 %v633
    %v635 = vpop.xlane.xlu0 %634
    %v636 = vsel %vm593, %v591, 0.0
    %637 = vadd.xlane.f32.xlu0 %v636
    %v638 = vpop.xlane.xlu0 %637
    %v639 = vsel %vm593, %v592, 0.0
    %640 = vadd.xlane.f32.xlu0 %v639
    %v641 = vpop.xlane.xlu0 %640
    %s642 = sld [smem:[#allocation2]]
    %v643 = vstv %s642
    %v644 = vadd.f32 %v596, %v643
    %v645 = vadd.f32 %v599, %v643
    %v646 = vadd.f32 %v602, %v643
    %v647 = vadd.f32 %v605, %v643
    %v648 = vadd.f32 %v608, %v643
    %v649 = vadd.f32 %v611, %v643
    %v650 = vadd.f32 %v614, %v643
    %v651 = vadd.f32 %v617, %v643
    %v652 = vadd.f32 %v620, %v643
    %v653 = vadd.f32 %v623, %v643
    %v654 = vadd.f32 %v626, %v643
    %v655 = vadd.f32 %v629, %v643
    %v656 = vadd.f32 %v632, %v643
    %v657 = vadd.f32 %v635, %v643
    %v658 = vadd.f32 %v638, %v643
    %v659 = vadd.f32 %v641, %v643
    %v676 = vlaneseq
    %v677 = vand.u32 %v676, 127
    %v678 = vlaneseq
    %v679 = vshrl.u32 %v678, 7
    %v680 = vsub.s32 %v677, %v679
    %v681 = vrot.slane %v644, %v680
    %v682 = vlaneseq
    %v683 = vshrl.u32 %v682, 7
    %v684 = vsub.s32 %v677, %v683
    %v685 = vrot.slane %v645, %v684
    %v686 = vlaneseq
    %v687 = vshrl.u32 %v686, 7
    %v688 = vsub.s32 %v677, %v687
    %v689 = vrot.slane %v646, %v688
    %v690 = vlaneseq
    %v691 = vshrl.u32 %v690, 7
    %v692 = vsub.s32 %v677, %v691
    %v693 = vrot.slane %v647, %v692
    %v694 = vlaneseq
    %v695 = vshrl.u32 %v694, 7
    %v696 = vsub.s32 %v677, %v695
    %v697 = vrot.slane %v648, %v696
    %v698 = vlaneseq
    %v699 = vshrl.u32 %v698, 7
    %v700 = vsub.s32 %v677, %v699
    %v701 = vrot.slane %v649, %v700
    %v702 = vlaneseq
    %v703 = vshrl.u32 %v702, 7
    %v704 = vsub.s32 %v677, %v703
    %v705 = vrot.slane %v650, %v704
    %v706 = vlaneseq
    %v707 = vshrl.u32 %v706, 7
    %v708 = vsub.s32 %v677, %v707
    %v709 = vrot.slane %v651, %v708
    %v710 = vlaneseq
    %v711 = vshrl.u32 %v710, 7
    %v712 = vsub.s32 %v677, %v711
    %v713 = vrot.slane %v652, %v712
    %v714 = vlaneseq
    %v715 = vshrl.u32 %v714, 7
    %v716 = vsub.s32 %v677, %v715
    %v717 = vrot.slane %v653, %v716
    %v718 = vlaneseq
    %v719 = vshrl.u32 %v718, 7
    %v720 = vsub.s32 %v677, %v719
    %v721 = vrot.slane %v654, %v720
    %v722 = vlaneseq
    %v723 = vshrl.u32 %v722, 7
    %v724 = vsub.s32 %v677, %v723
    %v725 = vrot.slane %v655, %v724
    %v726 = vlaneseq
    %v727 = vshrl.u32 %v726, 7
    %v728 = vsub.s32 %v677, %v727
    %v729 = vrot.slane %v656, %v728
    %v730 = vlaneseq
    %v731 = vshrl.u32 %v730, 7
    %v732 = vsub.s32 %v677, %v731
    %v733 = vrot.slane %v657, %v732
    %v734 = vlaneseq
    %v735 = vshrl.u32 %v734, 7
    %v736 = vsub.s32 %v677, %v735
    %v737 = vrot.slane %v658, %v736
    %v738 = vlaneseq
    %v739 = vshrl.u32 %v738, 7
    %v740 = vsub.s32 %v677, %v739
    %v741 = vrot.slane %v659, %v740
    %vm742 = vcmask 1041409
    %v743 = vsel %vm742, %v685, %v681
    %vm744 = vcmask 1042434
    %v745 = vsel %vm744, %v689, %v743
    %vm746 = vcmask 1043459
    %v747 = vsel %vm746, %v693, %v745
    %vm748 = vcmask 1044484
    %v749 = vsel %vm748, %v697, %v747
    %vm750 = vcmask 1045509
    %v751 = vsel %vm750, %v701, %v749
    %vm752 = vcmask 1046534
    %v753 = vsel %vm752, %v705, %v751
    %vm754 = vcmask 1047559
    %v755 = vsel %vm754, %v709, %v753
    %v756 = vsel %vm742, %v717, %v713
    %v757 = vsel %vm744, %v721, %v756
    %v758 = vsel %vm746, %v725, %v757
    %v759 = vsel %vm748, %v729, %v758
    %v760 = vsel %vm750, %v733, %v759
    %v761 = vsel %vm752, %v737, %v760
    %v762 = vsel %vm754, %v741, %v761
    %vm765 = vcmask 64512
    %v766 = vsel %vm765, %v755, -inf
    %767 = vmax.xlane.f32.xlu0 %v766
    %v768 = vpop.xlane.xlu0 %767
    %v769 = vsel %vm765, %v762, -inf
    %770 = vmax.xlane.f32.xlu0 %v769
    %v771 = vpop.xlane.xlu0 %770
    %v774 = vlaneseq
    %v775 = vshrl.u32 %v774, 7
    %v776 = vsub.s32 0, %v775
    %v777 = vrot.slane %v768, %v776
    %v778 = vlaneseq
    %v779 = vshrl.u32 %v778, 7
    %v780 = vsub.s32 1, %v779
    %v781 = vrot.slane %v768, %v780
    %v782 = vlaneseq
    %v783 = vshrl.u32 %v782, 7
    %v784 = vsub.s32 2, %v783
    %v785 = vrot.slane %v768, %v784
    %v786 = vlaneseq
    %v787 = vshrl.u32 %v786, 7
    %v788 = vsub.s32 3, %v787
    %v789 = vrot.slane %v768, %v788
    %v790 = vlaneseq
    %v791 = vshrl.u32 %v790, 7
    %v792 = vsub.s32 4, %v791
    %v793 = vrot.slane %v768, %v792
    %v794 = vlaneseq
    %v795 = vshrl.u32 %v794, 7
    %v796 = vsub.s32 5, %v795
    %v797 = vrot.slane %v768, %v796
    %v798 = vlaneseq
    %v799 = vshrl.u32 %v798, 7
    %v800 = vsub.s32 6, %v799
    %v801 = vrot.slane %v768, %v800
    %v802 = vlaneseq
    %v803 = vshrl.u32 %v802, 7
    %v804 = vsub.s32 7, %v803
    %v805 = vrot.slane %v768, %v804
    %v806 = vlaneseq
    %v807 = vshrl.u32 %v806, 7
    %v808 = vsub.s32 0, %v807
    %v809 = vrot.slane %v771, %v808
    %v810 = vlaneseq
    %v811 = vshrl.u32 %v810, 7
    %v812 = vsub.s32 1, %v811
    %v813 = vrot.slane %v771, %v812
    %v814 = vlaneseq
    %v815 = vshrl.u32 %v814, 7
    %v816 = vsub.s32 2, %v815
    %v817 = vrot.slane %v771, %v816
    %v818 = vlaneseq
    %v819 = vshrl.u32 %v818, 7
    %v820 = vsub.s32 3, %v819
    %v821 = vrot.slane %v771, %v820
    %v822 = vlaneseq
    %v823 = vshrl.u32 %v822, 7
    %v824 = vsub.s32 4, %v823
    %v825 = vrot.slane %v771, %v824
    %v826 = vlaneseq
    %v827 = vshrl.u32 %v826, 7
    %v828 = vsub.s32 5, %v827
    %v829 = vrot.slane %v771, %v828
    %v830 = vlaneseq
    %v831 = vshrl.u32 %v830, 7
    %v832 = vsub.s32 6, %v831
    %v833 = vrot.slane %v771, %v832
    %v834 = vlaneseq
    %v835 = vshrl.u32 %v834, 7
    %v836 = vsub.s32 7, %v835
    %v837 = vrot.slane %v771, %v836
    %v854 = vsub.f32 %v644, %v777
    %v855 = vsub.f32 %v645, %v781
    %v856 = vsub.f32 %v646, %v785
    %v857 = vsub.f32 %v647, %v789
    %v858 = vsub.f32 %v648, %v793
    %v859 = vsub.f32 %v649, %v797
    %v860 = vsub.f32 %v650, %v801
    %v861 = vsub.f32 %v651, %v805
    %v862 = vsub.f32 %v652, %v809
    %v863 = vsub.f32 %v653, %v813
    %v864 = vsub.f32 %v654, %v817
    %v865 = vsub.f32 %v655, %v821
    %v866 = vsub.f32 %v656, %v825
    %v867 = vsub.f32 %v657, %v829
    %v868 = vsub.f32 %v658, %v833
    %v869 = vsub.f32 %v659, %v837
    %v870 = vmul.f32 %v854, 1.442695
    %v871 = vpow.pop %v870
    %v872 = vmul.f32 %v855, 1.442695
    %v873 = vpow.pop %v872
    %v874 = vmul.f32 %v856, 1.442695
    %v875 = vpow.pop %v874
    %v876 = vmul.f32 %v857, 1.442695
    %v877 = vpow.pop %v876
    %v878 = vmul.f32 %v858, 1.442695
    %v879 = vpow.pop %v878
    %v880 = vmul.f32 %v859, 1.442695
    %v881 = vpow.pop %v880
    %v882 = vmul.f32 %v860, 1.442695
    %v883 = vpow.pop %v882
    %v884 = vmul.f32 %v861, 1.442695
    %v885 = vpow.pop %v884
    %v886 = vmul.f32 %v862, 1.442695
    %v887 = vpow.pop %v886
    %v888 = vmul.f32 %v863, 1.442695
    %v889 = vpow.pop %v888
    %v890 = vmul.f32 %v864, 1.442695
    %v891 = vpow.pop %v890
    %v892 = vmul.f32 %v865, 1.442695
    %v893 = vpow.pop %v892
    %v894 = vmul.f32 %v866, 1.442695
    %v895 = vpow.pop %v894
    %v896 = vmul.f32 %v867, 1.442695
    %v897 = vpow.pop %v896
    %v898 = vmul.f32 %v868, 1.442695
    %v899 = vpow.pop %v898
    %v900 = vmul.f32 %v869, 1.442695
    %v901 = vpow.pop %v900
    %918 = vset.pattern.permute.xlu0 0
    %919 = vperm.xlu0 %918, %v871
    %v920 = vpop.permute.xlu0 %919
    %921 = vset.pattern.permute.xlu0 0
    %922 = vperm.xlu0 %921, %v873
    %v923 = vpop.permute.xlu0 %922
    %924 = vset.pattern.permute.xlu0 0
    %925 = vperm.xlu0 %924, %v875
    %v926 = vpop.permute.xlu0 %925
    %927 = vset.pattern.permute.xlu0 0
    %928 = vperm.xlu0 %927, %v877
    %v929 = vpop.permute.xlu0 %928
    %930 = vset.pattern.permute.xlu0 0
    %931 = vperm.xlu0 %930, %v879
    %v932 = vpop.permute.xlu0 %931
    %933 = vset.pattern.permute.xlu0 0
    %934 = vperm.xlu0 %933, %v881
    %v935 = vpop.permute.xlu0 %934
    %936 = vset.pattern.permute.xlu0 0
    %937 = vperm.xlu0 %936, %v883
    %v938 = vpop.permute.xlu0 %937
    %939 = vset.pattern.permute.xlu0 0
    %940 = vperm.xlu0 %939, %v885
    %v941 = vpop.permute.xlu0 %940
    %942 = vset.pattern.permute.xlu0 0
    %943 = vperm.xlu0 %942, %v887
    %v944 = vpop.permute.xlu0 %943
    %945 = vset.pattern.permute.xlu0 0
    %946 = vperm.xlu0 %945, %v889
    %v947 = vpop.permute.xlu0 %946
    %948 = vset.pattern.permute.xlu0 0
    %949 = vperm.xlu0 %948, %v891
    %v950 = vpop.permute.xlu0 %949
    %951 = vset.pattern.permute.xlu0 0
    %952 = vperm.xlu0 %951, %v893
    %v953 = vpop.permute.xlu0 %952
    %954 = vset.pattern.permute.xlu0 0
    %955 = vperm.xlu0 %954, %v895
    %v956 = vpop.permute.xlu0 %955
    %957 = vset.pattern.permute.xlu0 0
    %958 = vperm.xlu0 %957, %v897
    %v959 = vpop.permute.xlu0 %958
    %960 = vset.pattern.permute.xlu0 0
    %961 = vperm.xlu0 %960, %v899
    %v962 = vpop.permute.xlu0 %961
    %963 = vset.pattern.permute.xlu0 0
    %964 = vperm.xlu0 %963, %v901
    %v965 = vpop.permute.xlu0 %964
    %v966 = vlaneseq
    %v967 = vshrl.u32 %v966, 7
    %v968 = vsub.s32 %v677, %v967
    %v969 = vrot.slane %v920, %v968
    %v970 = vlaneseq
    %v971 = vshrl.u32 %v970, 7
    %v972 = vsub.s32 %v677, %v971
    %v973 = vrot.slane %v923, %v972
    %v974 = vlaneseq
    %v975 = vshrl.u32 %v974, 7
    %v976 = vsub.s32 %v677, %v975
    %v977 = vrot.slane %v926, %v976
    %v978 = vlaneseq
    %v979 = vshrl.u32 %v978, 7
    %v980 = vsub.s32 %v677, %v979
    %v981 = vrot.slane %v929, %v980
    %v982 = vlaneseq
    %v983 = vshrl.u32 %v982, 7
    %v984 = vsub.s32 %v677, %v983
    %v985 = vrot.slane %v932, %v984
    %v986 = vlaneseq
    %v987 = vshrl.u32 %v986, 7
    %v988 = vsub.s32 %v677, %v987
    %v989 = vrot.slane %v935, %v988
    %v990 = vlaneseq
    %v991 = vshrl.u32 %v990, 7
    %v992 = vsub.s32 %v677, %v991
    %v993 = vrot.slane %v938, %v992
    %v994 = vlaneseq
    %v995 = vshrl.u32 %v994, 7
    %v996 = vsub.s32 %v677, %v995
    %v997 = vrot.slane %v941, %v996
    %v998 = vlaneseq
    %v999 = vshrl.u32 %v998, 7
    %v1000 = vsub.s32 %v677, %v999
    %v1001 = vrot.slane %v944, %v1000
    %v1002 = vlaneseq
    %v1003 = vshrl.u32 %v1002, 7
    %v1004 = vsub.s32 %v677, %v1003
    %v1005 = vrot.slane %v947, %v1004
    %v1006 = vlaneseq
    %v1007 = vshrl.u32 %v1006, 7
    %v1008 = vsub.s32 %v677, %v1007
    %v1009 = vrot.slane %v950, %v1008
    %v1010 = vlaneseq
    %v1011 = vshrl.u32 %v1010, 7
    %v1012 = vsub.s32 %v677, %v1011
    %v1013 = vrot.slane %v953, %v1012
    %v1014 = vlaneseq
    %v1015 = vshrl.u32 %v1014, 7
    %v1016 = vsub.s32 %v677, %v1015
    %v1017 = vrot.slane %v956, %v1016
    %v1018 = vlaneseq
    %v1019 = vshrl.u32 %v1018, 7
    %v1020 = vsub.s32 %v677, %v1019
    %v1021 = vrot.slane %v959, %v1020
    %v1022 = vlaneseq
    %v1023 = vshrl.u32 %v1022, 7
    %v1024 = vsub.s32 %v677, %v1023
    %v1025 = vrot.slane %v962, %v1024
    %v1026 = vlaneseq
    %v1027 = vshrl.u32 %v1026, 7
    %v1028 = vsub.s32 %v677, %v1027
    %v1029 = vrot.slane %v965, %v1028
    %v1030 = vsel %vm742, %v973, %v969
    %v1031 = vsel %vm744, %v977, %v1030
    %v1032 = vsel %vm746, %v981, %v1031
    %v1033 = vsel %vm748, %v985, %v1032
    %v1034 = vsel %vm750, %v989, %v1033
    %v1035 = vsel %vm752, %v993, %v1034
    %v1036 = vsel %vm754, %v997, %v1035
    %v1037 = vsel %vm742, %v1005, %v1001
    %v1038 = vsel %vm744, %v1009, %v1037
    %v1039 = vsel %vm746, %v1013, %v1038
    %v1040 = vsel %vm748, %v1017, %v1039
    %v1041 = vsel %vm750, %v1021, %v1040
    %v1042 = vsel %vm752, %v1025, %v1041
    %v1043 = vsel %vm754, %v1029, %v1042
    %v1046 = vsel %vm765, %v1036, 0.0
    %1047 = vadd.xlane.f32.xlu0 %v1046
    %v1048 = vpop.xlane.xlu0 %1047
    %v1049 = vsel %vm765, %v1043, 0.0
    %1050 = vadd.xlane.f32.xlu0 %v1049
    %v1051 = vpop.xlane.xlu0 %1050
    %v1052 = vrcp.pop %v1048
    %v1053 = vrcp.pop %v1051
    %v1056 = vlaneseq
    %v1057 = vshrl.u32 %v1056, 7
    %v1058 = vsub.s32 0, %v1057
    %v1059 = vrot.slane %v1052, %v1058
    %v1060 = vlaneseq
    %v1061 = vshrl.u32 %v1060, 7
    %v1062 = vsub.s32 1, %v1061
    %v1063 = vrot.slane %v1052, %v1062
    %v1064 = vlaneseq
    %v1065 = vshrl.u32 %v1064, 7
    %v1066 = vsub.s32 2, %v1065
    %v1067 = vrot.slane %v1052, %v1066
    %v1068 = vlaneseq
    %v1069 = vshrl.u32 %v1068, 7
    %v1070 = vsub.s32 3, %v1069
    %v1071 = vrot.slane %v1052, %v1070
    %v1072 = vlaneseq
    %v1073 = vshrl.u32 %v1072, 7
    %v1074 = vsub.s32 4, %v1073
    %v1075 = vrot.slane %v1052, %v1074
    %v1076 = vlaneseq
    %v1077 = vshrl.u32 %v1076, 7
    %v1078 = vsub.s32 5, %v1077
    %v1079 = vrot.slane %v1052, %v1078
    %v1080 = vlaneseq
    %v1081 = vshrl.u32 %v1080, 7
    %v1082 = vsub.s32 6, %v1081
    %v1083 = vrot.slane %v1052, %v1082
    %v1084 = vlaneseq
    %v1085 = vshrl.u32 %v1084, 7
    %v1086 = vsub.s32 7, %v1085
    %v1087 = vrot.slane %v1052, %v1086
    %v1088 = vlaneseq
    %v1089 = vshrl.u32 %v1088, 7
    %v1090 = vsub.s32 0, %v1089
    %v1091 = vrot.slane %v1053, %v1090
    %v1092 = vlaneseq
    %v1093 = vshrl.u32 %v1092, 7
    %v1094 = vsub.s32 1, %v1093
    %v1095 = vrot.slane %v1053, %v1094
    %v1096 = vlaneseq
    %v1097 = vshrl.u32 %v1096, 7
    %v1098 = vsub.s32 2, %v1097
    %v1099 = vrot.slane %v1053, %v1098
    %v1100 = vlaneseq
    %v1101 = vshrl.u32 %v1100, 7
    %v1102 = vsub.s32 3, %v1101
    %v1103 = vrot.slane %v1053, %v1102
    %v1104 = vlaneseq
    %v1105 = vshrl.u32 %v1104, 7
    %v1106 = vsub.s32 4, %v1105
    %v1107 = vrot.slane %v1053, %v1106
    %v1108 = vlaneseq
    %v1109 = vshrl.u32 %v1108, 7
    %v1110 = vsub.s32 5, %v1109
    %v1111 = vrot.slane %v1053, %v1110
    %v1112 = vlaneseq
    %v1113 = vshrl.u32 %v1112, 7
    %v1114 = vsub.s32 6, %v1113
    %v1115 = vrot.slane %v1053, %v1114
    %v1116 = vlaneseq
    %v1117 = vshrl.u32 %v1116, 7
    %v1118 = vsub.s32 7, %v1117
    %v1119 = vrot.slane %v1053, %v1118
    %v1136 = vmul.f32 %v871, %v1059
    %v1137 = vmul.f32 %v873, %v1063
    %v1138 = vmul.f32 %v875, %v1067
    %v1139 = vmul.f32 %v877, %v1071
    %v1140 = vmul.f32 %v879, %v1075
    %v1141 = vmul.f32 %v881, %v1079
    %v1142 = vmul.f32 %v883, %v1083
    %v1143 = vmul.f32 %v885, %v1087
    %v1144 = vmul.f32 %v887, %v1091
    %v1145 = vmul.f32 %v889, %v1095
    %v1146 = vmul.f32 %v891, %v1099
    %v1147 = vmul.f32 %v893, %v1103
    %v1148 = vmul.f32 %v895, %v1107
    %v1149 = vmul.f32 %v897, %v1111
    %v1150 = vmul.f32 %v899, %v1115
    %v1151 = vmul.f32 %v901, %v1119
    %1168 = vset.pattern.permute.xlu0 0
    %1169 = vperm.xlu0 %1168, %v1136
    %v1170 = vpop.permute.xlu0 %1169
    %1171 = vset.pattern.permute.xlu0 0
    %1172 = vperm.xlu0 %1171, %v1137
    %v1173 = vpop.permute.xlu0 %1172
    %1174 = vset.pattern.permute.xlu0 0
    %1175 = vperm.xlu0 %1174, %v1138
    %v1176 = vpop.permute.xlu0 %1175
    %1177 = vset.pattern.permute.xlu0 0
    %1178 = vperm.xlu0 %1177, %v1139
    %v1179 = vpop.permute.xlu0 %1178
    %1180 = vset.pattern.permute.xlu0 0
    %1181 = vperm.xlu0 %1180, %v1140
    %v1182 = vpop.permute.xlu0 %1181
    %1183 = vset.pattern.permute.xlu0 0
    %1184 = vperm.xlu0 %1183, %v1141
    %v1185 = vpop.permute.xlu0 %1184
    %1186 = vset.pattern.permute.xlu0 0
    %1187 = vperm.xlu0 %1186, %v1142
    %v1188 = vpop.permute.xlu0 %1187
    %1189 = vset.pattern.permute.xlu0 0
    %1190 = vperm.xlu0 %1189, %v1143
    %v1191 = vpop.permute.xlu0 %1190
    %1192 = vset.pattern.permute.xlu0 0
    %1193 = vperm.xlu0 %1192, %v1144
    %v1194 = vpop.permute.xlu0 %1193
    %1195 = vset.pattern.permute.xlu0 0
    %1196 = vperm.xlu0 %1195, %v1145
    %v1197 = vpop.permute.xlu0 %1196
    %1198 = vset.pattern.permute.xlu0 0
    %1199 = vperm.xlu0 %1198, %v1146
    %v1200 = vpop.permute.xlu0 %1199
    %1201 = vset.pattern.permute.xlu0 0
    %1202 = vperm.xlu0 %1201, %v1147
    %v1203 = vpop.permute.xlu0 %1202
    %1204 = vset.pattern.permute.xlu0 0
    %1205 = vperm.xlu0 %1204, %v1148
    %v1206 = vpop.permute.xlu0 %1205
    %1207 = vset.pattern.permute.xlu0 0
    %1208 = vperm.xlu0 %1207, %v1149
    %v1209 = vpop.permute.xlu0 %1208
    %1210 = vset.pattern.permute.xlu0 0
    %1211 = vperm.xlu0 %1210, %v1150
    %v1212 = vpop.permute.xlu0 %1211
    %1213 = vset.pattern.permute.xlu0 0
    %1214 = vperm.xlu0 %1213, %v1151
    %v1215 = vpop.permute.xlu0 %1214
    %v1216 = vlaneseq
    %v1217 = vshrl.u32 %v1216, 7
    %v1218 = vsub.s32 %v677, %v1217
    %v1219 = vrot.slane %v1170, %v1218
    %v1220 = vlaneseq
    %v1221 = vshrl.u32 %v1220, 7
    %v1222 = vsub.s32 %v677, %v1221
    %v1223 = vrot.slane %v1173, %v1222
    %v1224 = vlaneseq
    %v1225 = vshrl.u32 %v1224, 7
    %v1226 = vsub.s32 %v677, %v1225
    %v1227 = vrot.slane %v1176, %v1226
    %v1228 = vlaneseq
    %v1229 = vshrl.u32 %v1228, 7
    %v1230 = vsub.s32 %v677, %v1229
    %v1231 = vrot.slane %v1179, %v1230
    %v1232 = vlaneseq
    %v1233 = vshrl.u32 %v1232, 7
    %v1234 = vsub.s32 %v677, %v1233
    %v1235 = vrot.slane %v1182, %v1234
    %v1236 = vlaneseq
    %v1237 = vshrl.u32 %v1236, 7
    %v1238 = vsub.s32 %v677, %v1237
    %v1239 = vrot.slane %v1185, %v1238
    %v1240 = vlaneseq
    %v1241 = vshrl.u32 %v1240, 7
    %v1242 = vsub.s32 %v677, %v1241
    %v1243 = vrot.slane %v1188, %v1242
    %v1244 = vlaneseq
    %v1245 = vshrl.u32 %v1244, 7
    %v1246 = vsub.s32 %v677, %v1245
    %v1247 = vrot.slane %v1191, %v1246
    %v1248 = vlaneseq
    %v1249 = vshrl.u32 %v1248, 7
    %v1250 = vsub.s32 %v677, %v1249
    %v1251 = vrot.slane %v1194, %v1250
    %v1252 = vlaneseq
    %v1253 = vshrl.u32 %v1252, 7
    %v1254 = vsub.s32 %v677, %v1253
    %v1255 = vrot.slane %v1197, %v1254
    %v1256 = vlaneseq
    %v1257 = vshrl.u32 %v1256, 7
    %v1258 = vsub.s32 %v677, %v1257
    %v1259 = vrot.slane %v1200, %v1258
    %v1260 = vlaneseq
    %v1261 = vshrl.u32 %v1260, 7
    %v1262 = vsub.s32 %v677, %v1261
    %v1263 = vrot.slane %v1203, %v1262
    %v1264 = vlaneseq
    %v1265 = vshrl.u32 %v1264, 7
    %v1266 = vsub.s32 %v677, %v1265
    %v1267 = vrot.slane %v1206, %v1266
    %v1268 = vlaneseq
    %v1269 = vshrl.u32 %v1268, 7
    %v1270 = vsub.s32 %v677, %v1269
    %v1271 = vrot.slane %v1209, %v1270
    %v1272 = vlaneseq
    %v1273 = vshrl.u32 %v1272, 7
    %v1274 = vsub.s32 %v677, %v1273
    %v1275 = vrot.slane %v1212, %v1274
    %v1276 = vlaneseq
    %v1277 = vshrl.u32 %v1276, 7
    %v1278 = vsub.s32 %v677, %v1277
    %v1279 = vrot.slane %v1215, %v1278
    %v1280 = vsel %vm742, %v1223, %v1219
    %v1281 = vsel %vm744, %v1227, %v1280
    %v1282 = vsel %vm746, %v1231, %v1281
    %v1283 = vsel %vm748, %v1235, %v1282
    %v1284 = vsel %vm750, %v1239, %v1283
    %v1285 = vsel %vm752, %v1243, %v1284
    %v1286 = vsel %vm754, %v1247, %v1285
    %v1287 = vsel %vm742, %v1255, %v1251
    %v1288 = vsel %vm744, %v1259, %v1287
    %v1289 = vsel %vm746, %v1263, %v1288
    %v1290 = vsel %vm748, %v1267, %v1289
    %v1291 = vsel %vm750, %v1271, %v1290
    %v1292 = vsel %vm752, %v1275, %v1291
    %v1293 = vsel %vm754, %v1279, %v1292
    %1296 = vst.msk [vmem:[%s22] sm:$0xff] %vm765, %v1286
    %1297 = vst.msk [vmem:[%s22 + $0x8] sm:$0xff] %vm765, %v1293
    %v1314 = vmul.f32 %v180, %v1170
    %v1315 = vmul.f32 %v181, %v1173
    %v1316 = vmul.f32 %v182, %v1176
    %v1317 = vmul.f32 %v183, %v1179
    %v1318 = vmul.f32 %v184, %v1182
    %v1319 = vmul.f32 %v185, %v1185
    %v1320 = vmul.f32 %v186, %v1188
    %v1321 = vmul.f32 %v187, %v1191
    %v1322 = vmul.f32 %v188, %v1194
    %v1323 = vmul.f32 %v189, %v1197
    %v1324 = vmul.f32 %v190, %v1200
    %v1325 = vmul.f32 %v191, %v1203
    %v1326 = vmul.f32 %v192, %v1206
    %v1327 = vmul.f32 %v193, %v1209
    %v1328 = vmul.f32 %v194, %v1212
    %v1329 = vmul.f32 %v195, %v1215
    %v1330 = vsel %vm236, %v1314, 0.0
    %v1331 = vrot.slane %v1330, 4
    %v1332 = vadd.f32 %v1330, %v1331
    %v1333 = vrot.slane %v1332, 2
    %v1334 = vadd.f32 %v1332, %v1333
    %v1335 = vrot.slane %v1334, 1
    %v1336 = vadd.f32 %v1334, %v1335
    %v1337 = vsel %vm236, %v1315, 0.0
    %v1338 = vrot.slane %v1337, 4
    %v1339 = vadd.f32 %v1337, %v1338
    %v1340 = vrot.slane %v1339, 2
    %v1341 = vadd.f32 %v1339, %v1340
    %v1342 = vrot.slane %v1341, 1
    %v1343 = vadd.f32 %v1341, %v1342
    %v1344 = vsel %vm236, %v1316, 0.0
    %v1345 = vrot.slane %v1344, 4
    %v1346 = vadd.f32 %v1344, %v1345
    %v1347 = vrot.slane %v1346, 2
    %v1348 = vadd.f32 %v1346, %v1347
    %v1349 = vrot.slane %v1348, 1
    %v1350 = vadd.f32 %v1348, %v1349
    %v1351 = vsel %vm236, %v1317, 0.0
    %v1352 = vrot.slane %v1351, 4
    %v1353 = vadd.f32 %v1351, %v1352
    %v1354 = vrot.slane %v1353, 2
    %v1355 = vadd.f32 %v1353, %v1354
    %v1356 = vrot.slane %v1355, 1
    %v1357 = vadd.f32 %v1355, %v1356
    %v1358 = vsel %vm236, %v1318, 0.0
    %v1359 = vrot.slane %v1358, 4
    %v1360 = vadd.f32 %v1358, %v1359
    %v1361 = vrot.slane %v1360, 2
    %v1362 = vadd.f32 %v1360, %v1361
    %v1363 = vrot.slane %v1362, 1
    %v1364 = vadd.f32 %v1362, %v1363
    %v1365 = vsel %vm236, %v1319, 0.0
    %v1366 = vrot.slane %v1365, 4
    %v1367 = vadd.f32 %v1365, %v1366
    %v1368 = vrot.slane %v1367, 2
    %v1369 = vadd.f32 %v1367, %v1368
    %v1370 = vrot.slane %v1369, 1
    %v1371 = vadd.f32 %v1369, %v1370
    %v1372 = vsel %vm236, %v1320, 0.0
    %v1373 = vrot.slane %v1372, 4
    %v1374 = vadd.f32 %v1372, %v1373
    %v1375 = vrot.slane %v1374, 2
    %v1376 = vadd.f32 %v1374, %v1375
    %v1377 = vrot.slane %v1376, 1
    %v1378 = vadd.f32 %v1376, %v1377
    %v1379 = vsel %vm236, %v1321, 0.0
    %v1380 = vrot.slane %v1379, 4
    %v1381 = vadd.f32 %v1379, %v1380
    %v1382 = vrot.slane %v1381, 2
    %v1383 = vadd.f32 %v1381, %v1382
    %v1384 = vrot.slane %v1383, 1
    %v1385 = vadd.f32 %v1383, %v1384
    %v1386 = vsel %vm236, %v1322, 0.0
    %v1387 = vrot.slane %v1386, 4
    %v1388 = vadd.f32 %v1386, %v1387
    %v1389 = vrot.slane %v1388, 2
    %v1390 = vadd.f32 %v1388, %v1389
    %v1391 = vrot.slane %v1390, 1
    %v1392 = vadd.f32 %v1390, %v1391
    %v1393 = vsel %vm236, %v1323, 0.0
    %v1394 = vrot.slane %v1393, 4
    %v1395 = vadd.f32 %v1393, %v1394
    %v1396 = vrot.slane %v1395, 2
    %v1397 = vadd.f32 %v1395, %v1396
    %v1398 = vrot.slane %v1397, 1
    %v1399 = vadd.f32 %v1397, %v1398
    %v1400 = vsel %vm236, %v1324, 0.0
    %v1401 = vrot.slane %v1400, 4
    %v1402 = vadd.f32 %v1400, %v1401
    %v1403 = vrot.slane %v1402, 2
    %v1404 = vadd.f32 %v1402, %v1403
    %v1405 = vrot.slane %v1404, 1
    %v1406 = vadd.f32 %v1404, %v1405
    %v1407 = vsel %vm236, %v1325, 0.0
    %v1408 = vrot.slane %v1407, 4
    %v1409 = vadd.f32 %v1407, %v1408
    %v1410 = vrot.slane %v1409, 2
    %v1411 = vadd.f32 %v1409, %v1410
    %v1412 = vrot.slane %v1411, 1
    %v1413 = vadd.f32 %v1411, %v1412
    %v1414 = vsel %vm236, %v1326, 0.0
    %v1415 = vrot.slane %v1414, 4
    %v1416 = vadd.f32 %v1414, %v1415
    %v1417 = vrot.slane %v1416, 2
    %v1418 = vadd.f32 %v1416, %v1417
    %v1419 = vrot.slane %v1418, 1
    %v1420 = vadd.f32 %v1418, %v1419
    %v1421 = vsel %vm236, %v1327, 0.0
    %v1422 = vrot.slane %v1421, 4
    %v1423 = vadd.f32 %v1421, %v1422
    %v1424 = vrot.slane %v1423, 2
    %v1425 = vadd.f32 %v1423, %v1424
    %v1426 = vrot.slane %v1425, 1
    %v1427 = vadd.f32 %v1425, %v1426
    %v1428 = vsel %vm236, %v1328, 0.0
    %v1429 = vrot.slane %v1428, 4
    %v1430 = vadd.f32 %v1428, %v1429
    %v1431 = vrot.slane %v1430, 2
    %v1432 = vadd.f32 %v1430, %v1431
    %v1433 = vrot.slane %v1432, 1
    %v1434 = vadd.f32 %v1432, %v1433
    %v1435 = vsel %vm236, %v1329, 0.0
    %v1436 = vrot.slane %v1435, 4
    %v1437 = vadd.f32 %v1435, %v1436
    %v1438 = vrot.slane %v1437, 2
    %v1439 = vadd.f32 %v1437, %v1438
    %v1440 = vrot.slane %v1439, 1
    %v1441 = vadd.f32 %v1439, %v1440
    %v1450 = vsel %vm742, %v1343, %v1336
    %v1451 = vsel %vm744, %v1350, %v1450
    %v1452 = vsel %vm746, %v1357, %v1451
    %v1453 = vsel %vm748, %v1364, %v1452
    %v1454 = vsel %vm750, %v1371, %v1453
    %v1455 = vsel %vm752, %v1378, %v1454
    %v1456 = vsel %vm754, %v1385, %v1455
    %v1466 = vsel %vm742, %v1399, %v1392
    %v1467 = vsel %vm744, %v1406, %v1466
    %v1468 = vsel %vm746, %v1413, %v1467
    %v1469 = vsel %vm748, %v1420, %v1468
    %v1470 = vsel %vm750, %v1427, %v1469
    %v1471 = vsel %vm752, %v1434, %v1470
    %v1472 = vsel %vm754, %v1441, %v1471
    %1473 = vrot.lane.b32.xlu0 %v1472, 64
    %v1474 = vpop.permute.xlu0 %1473
    %v1476 = vsel %vm236, %v1456, %v1474
    %1477 = vst [vmem:[#allocation20] sm:$0xff] %v1476
    %v1478 = vld [vmem:[%s0] sm:$0xff]
    %1480 = vrot.lane.b32.xlu0 %v1476, 32
    %v1481 = vpop.permute.xlu0 %1480
    %v1483 = vsel %vm593, %v1478, %v1481
    %v1484 = vld [vmem:[#allocation3] sm:$0xff]
    %v1485 = vpack.c.bf16 %v1483, %v1483
    %v1486 = vpack.c.bf16 %v1481, %v1481
    %v1487 = vld [vmem:[%s10] sm:$0xff]
    %v1488 = vld [vmem:[%s10 + $0x8] sm:$0xf]
    %v1489 = vld [vmem:[%s10 + $0xc] sm:$0xff]
    %v1490 = vld [vmem:[%s10 + $0x14] sm:$0xf]
    %v1491 = vld [vmem:[%s10 + $0x18] sm:$0xff]
    %v1492 = vld [vmem:[%s10 + $0x20] sm:$0xf]
    %v1493 = vld [vmem:[%s10 + $0x24] sm:$0xff]
    %v1494 = vld [vmem:[%s10 + $0x2c] sm:$0xf]
    %v1495 = vld [vmem:[%s10 + $0x30] sm:$0xff]
    %v1496 = vld [vmem:[%s10 + $0x38] sm:$0xf]
    %v1497 = vld [vmem:[%s10 + $0x3c] sm:$0xff]
    %v1498 = vld [vmem:[%s10 + $0x44] sm:$0xf]
    %v1499 = vld [vmem:[%s10 + $0x48] sm:$0xff]
    %v1500 = vld [vmem:[%s10 + $0x50] sm:$0xf]
    %v1501 = vld [vmem:[%s10 + $0x54] sm:$0xff]
    %v1502 = vld [vmem:[%s10 + $0x5c] sm:$0xf]
    %v1503 = vld [vmem:[%s10 + $0x60] sm:$0xff]
    %v1504 = vld [vmem:[%s10 + $0x68] sm:$0xf]
    %v1505 = vld [vmem:[%s10 + $0x6c] sm:$0xff]
    %v1506 = vld [vmem:[%s10 + $0x74] sm:$0xf]
    %v1507 = vld [vmem:[%s10 + $0x78] sm:$0xff]
    %v1508 = vld [vmem:[%s10 + $0x80] sm:$0xf]
    %v1509 = vld [vmem:[%s10 + $0x84] sm:$0xff]
    %v1510 = vld [vmem:[%s10 + $0x8c] sm:$0xf]
    %v1511 = vld [vmem:[%s10 + $0x90] sm:$0xff]
    %v1512 = vld [vmem:[%s10 + $0x98] sm:$0xf]
    %v1513 = vld [vmem:[%s10 + $0x9c] sm:$0xff]
    %v1514 = vld [vmem:[%s10 + $0xa4] sm:$0xf]
    %v1515 = vld [vmem:[%s10 + $0xa8] sm:$0xff]
    %v1516 = vld [vmem:[%s10 + $0xb0] sm:$0xf]
    %v1517 = vld [vmem:[%s10 + $0xb4] sm:$0xff]
    %v1518 = vld [vmem:[%s10 + $0xbc] sm:$0xf]
    %v1519 = vld [vmem:[%s10 + $0xc0] sm:$0xff]
    %v1520 = vld [vmem:[%s10 + $0xc8] sm:$0xf]
    %v1521 = vld [vmem:[%s10 + $0xcc] sm:$0xff]
    %v1522 = vld [vmem:[%s10 + $0xd4] sm:$0xf]
    %v1523 = vld [vmem:[%s10 + $0xd8] sm:$0xff]
    %v1524 = vld [vmem:[%s10 + $0xe0] sm:$0xf]
    %v1525 = vld [vmem:[%s10 + $0xe4] sm:$0xff]
    %v1526 = vld [vmem:[%s10 + $0xec] sm:$0xf]
    %v1527 = vld [vmem:[%s12] sm:$0x7]
    %v1529 = vlaneseq
    %v1530 = vshrl.u32 %v1529, 7
    %v1531 = vsub.s32 0, %v1530
    %v1532 = vrot.slane %v1527, %v1531
    %v1533 = vlaneseq
    %v1534 = vshrl.u32 %v1533, 7
    %v1535 = vsub.s32 1, %v1534
    %v1536 = vrot.slane %v1527, %v1535
    %v1537 = vlaneseq
    %v1538 = vshrl.u32 %v1537, 7
    %v1539 = vsub.s32 2, %v1538
    %v1540 = vrot.slane %v1527, %v1539
    %v1584 = vunpack.c.l.b16 %v1487
    %v1585 = vunpack.c.h.b16 %v1487
    %v1586 = vunpack.c.l.b16 %v1488
    %v1587 = vunpack.c.l.b16 %v1489
    %v1588 = vunpack.c.h.b16 %v1489
    %v1589 = vunpack.c.l.b16 %v1490
    %v1590 = vunpack.c.l.b16 %v1491
    %v1591 = vunpack.c.h.b16 %v1491
    %v1592 = vunpack.c.l.b16 %v1492
    %v1593 = vunpack.c.l.b16 %v1493
    %v1594 = vunpack.c.h.b16 %v1493
    %v1595 = vunpack.c.l.b16 %v1494
    %v1596 = vunpack.c.l.b16 %v1495
    %v1597 = vunpack.c.h.b16 %v1495
    %v1598 = vunpack.c.l.b16 %v1496
    %v1599 = vunpack.c.l.b16 %v1497
    %v1600 = vunpack.c.h.b16 %v1497
    %v1601 = vunpack.c.l.b16 %v1498
    %v1602 = vunpack.c.l.b16 %v1499
    %v1603 = vunpack.c.h.b16 %v1499
    %v1604 = vunpack.c.l.b16 %v1500
    %v1605 = vunpack.c.l.b16 %v1501
    %v1606 = vunpack.c.h.b16 %v1501
    %v1607 = vunpack.c.l.b16 %v1502
    %v1608 = vunpack.c.l.b16 %v1503
    %v1609 = vunpack.c.h.b16 %v1503
    %v1610 = vunpack.c.l.b16 %v1504
    %v1611 = vunpack.c.l.b16 %v1505
    %v1612 = vunpack.c.h.b16 %v1505
    %v1613 = vunpack.c.l.b16 %v1506
    %v1614 = vunpack.c.l.b16 %v1507
    %v1615 = vunpack.c.h.b16 %v1507
    %v1616 = vunpack.c.l.b16 %v1508
    %v1617 = vunpack.c.l.b16 %v1509
    %v1618 = vunpack.c.h.b16 %v1509
    %v1619 = vunpack.c.l.b16 %v1510
    %v1620 = vunpack.c.l.b16 %v1511
    %v1621 = vunpack.c.h.b16 %v1511
    %v1622 = vunpack.c.l.b16 %v1512
    %v1623 = vunpack.c.l.b16 %v1513
    %v1624 = vunpack.c.h.b16 %v1513
    %v1625 = vunpack.c.l.b16 %v1514
    %v1626 = vunpack.c.l.b16 %v1515
    %v1627 = vunpack.c.h.b16 %v1515
    %v1628 = vunpack.c.l.b16 %v1516
    %v1629 = vunpack.c.l.b16 %v1517
    %v1630 = vunpack.c.h.b16 %v1517
    %v1631 = vunpack.c.l.b16 %v1518
    %v1632 = vunpack.c.l.b16 %v1519
    %v1633 = vunpack.c.h.b16 %v1519
    %v1634 = vunpack.c.l.b16 %v1520
    %v1635 = vunpack.c.l.b16 %v1521
    %v1636 = vunpack.c.h.b16 %v1521
    %v1637 = vunpack.c.l.b16 %v1522
    %v1638 = vunpack.c.l.b16 %v1523
    %v1639 = vunpack.c.h.b16 %v1523
    %v1640 = vunpack.c.l.b16 %v1524
    %v1641 = vunpack.c.l.b16 %v1525
    %v1642 = vunpack.c.h.b16 %v1525
    %v1643 = vunpack.c.l.b16 %v1526
    %v1644 = vpack.c.b16 %v1587, %v1584
    %v1645 = vpack.c.b16 %v1588, %v1585
    %v1646 = vpack.c.b16 %v1589, %v1586
    %v1647 = vpack.c.b16 %v1593, %v1590
    %v1648 = vpack.c.b16 %v1594, %v1591
    %v1649 = vpack.c.b16 %v1595, %v1592
    %v1650 = vpack.c.b16 %v1599, %v1596
    %v1651 = vpack.c.b16 %v1600, %v1597
    %v1652 = vpack.c.b16 %v1601, %v1598
    %v1653 = vpack.c.b16 %v1605, %v1602
    %v1654 = vpack.c.b16 %v1606, %v1603
    %v1655 = vpack.c.b16 %v1607, %v1604
    %v1656 = vpack.c.b16 %v1611, %v1608
    %v1657 = vpack.c.b16 %v1612, %v1609
    %v1658 = vpack.c.b16 %v1613, %v1610
    %v1659 = vpack.c.b16 %v1617, %v1614
    %v1660 = vpack.c.b16 %v1618, %v1615
    %v1661 = vpack.c.b16 %v1619, %v1616
    %v1662 = vpack.c.b16 %v1623, %v1620
    %v1663 = vpack.c.b16 %v1624, %v1621
    %v1664 = vpack.c.b16 %v1625, %v1622
    %v1665 = vpack.c.b16 %v1629, %v1626
    %v1666 = vpack.c.b16 %v1630, %v1627
    %v1667 = vpack.c.b16 %v1631, %v1628
    %v1668 = vpack.c.b16 %v1635, %v1632
    %v1669 = vpack.c.b16 %v1636, %v1633
    %v1670 = vpack.c.b16 %v1637, %v1634
    %v1671 = vpack.c.b16 %v1641, %v1638
    %v1672 = vpack.c.b16 %v1642, %v1639
    %v1673 = vpack.c.b16 %v1643, %v1640
    %v1705 = vsel %vm593, %v1486, 0
    %1707 = vmatprep.subr.bf16.mxu0 %v1666
    %1708 = vmatpush1.bf16.msra.mxu0 %v1665
    %1709 = vmatprep.subr.bf16.mxu0 %v1663
    %1710 = vmatpush1.bf16.msra.mxu0 %v1662
    %1711 = vmatprep.subr.bf16.mxu0 %v1660
    %1712 = vmatpush1.bf16.msra.mxu0 %v1659
    %1713 = vmatprep.subr.bf16.mxu0 %v1657
    %1714 = vmatpush1.bf16.msra.mxu0 %v1656
    %1715 = vmatprep.subr.bf16.mxu0 %v1654
    %1716 = vmatpush1.bf16.msra.mxu0 %v1653
    %1717 = vmatprep.subr.bf16.mxu0 %v1651
    %1718 = vmatpush1.bf16.msra.mxu0 %v1650
    %1719 = vmatprep.subr.bf16.mxu0 %v1648
    %1720 = vmatpush1.bf16.msra.mxu0 %v1647
    %1721 = vmatprep.subr.bf16.mxu0 %v1645
    %1722 = vmatpush1.bf16.msra.mxu0 %v1644
    %1723 = vmatprep.subr.bf16.mxu0 0
    %1724 = vmatpush2.bf16.msra.mxu0 0
    %1725 = vmatprep.subr.bf16.mxu0 0
    %1726 = vmatpush2.bf16.msra.mxu0 0
    %1727 = vmatprep.subr.bf16.mxu0 0
    %1728 = vmatpush2.bf16.msra.mxu0 0
    %1729 = vmatprep.subr.bf16.mxu0 0
    %1730 = vmatpush2.bf16.msra.mxu0 0
    %1731 = vmatprep.subr.bf16.mxu0 0
    %1732 = vmatpush2.bf16.msra.mxu0 0
    %1733 = vmatprep.subr.bf16.mxu0 0
    %1734 = vmatpush2.bf16.msra.mxu0 0
    %1735 = vmatprep.subr.bf16.mxu0 %v1672
    %1736 = vmatpush2.bf16.msra.mxu0 %v1671
    %1737 = vmatprep.subr.bf16.mxu0 %v1669
    %1738 = vmatpush2.bf16.msra.mxu0 %v1668
    %1739 = vmatprep.mubr.bf16.mxu0 %v1705
    %1740 = vmatmul.mubr.bf16.gmra.mxu0 %v1485
    %v1741 = vpop.f32.mrf.mxu0
    %v1742 = vadd.f32 %v1532, %v1741
    %v1743 = vpop.f32.mrf.mxu0
    %v1744 = vadd.f32 %v1536, %v1743
    %v1745 = vpop.f32.mrf.mxu0
    %v1746 = vpop.f32.mrf.mxu0
    %1747 = vdwg.mxu0
    %1748 = vmatprep.subr.bf16.mxu0 0
    %1749 = vmatpush1.bf16.msra.mxu0 %v1667
    %1750 = vmatprep.subr.bf16.mxu0 0
    %1751 = vmatpush1.bf16.msra.mxu0 %v1664
    %1752 = vmatprep.subr.bf16.mxu0 0
    %1753 = vmatpush1.bf16.msra.mxu0 %v1661
    %1754 = vmatprep.subr.bf16.mxu0 0
    %1755 = vmatpush1.bf16.msra.mxu0 %v1658
    %1756 = vmatprep.subr.bf16.mxu0 0
    %1757 = vmatpush1.bf16.msra.mxu0 %v1655
    %1758 = vmatprep.subr.bf16.mxu0 0
    %1759 = vmatpush1.bf16.msra.mxu0 %v1652
    %1760 = vmatprep.subr.bf16.mxu0 0
    %1761 = vmatpush1.bf16.msra.mxu0 %v1649
    %1762 = vmatprep.subr.bf16.mxu0 0
    %1763 = vmatpush1.bf16.msra.mxu0 %v1646
    %1764 = vmatprep.subr.bf16.mxu0 0
    %1765 = vmatpush2.bf16.msra.mxu0 0
    %1766 = vmatprep.subr.bf16.mxu0 0
    %1767 = vmatpush2.bf16.msra.mxu0 0
    %1768 = vmatprep.subr.bf16.mxu0 0
    %1769 = vmatpush2.bf16.msra.mxu0 0
    %1770 = vmatprep.subr.bf16.mxu0 0
    %1771 = vmatpush2.bf16.msra.mxu0 0
    %1772 = vmatprep.subr.bf16.mxu0 0
    %1773 = vmatpush2.bf16.msra.mxu0 0
    %1774 = vmatprep.subr.bf16.mxu0 0
    %1775 = vmatpush2.bf16.msra.mxu0 0
    %1776 = vmatprep.subr.bf16.mxu0 0
    %1777 = vmatpush2.bf16.msra.mxu0 %v1673
    %1778 = vmatprep.subr.bf16.mxu0 0
    %1779 = vmatpush2.bf16.msra.mxu0 %v1670
    %1780 = vmatprep.mubr.bf16.mxu0 %v1705
    %1781 = vmatmul.mubr.bf16.gmra.mxu0 %v1485
    %v1782 = vpop.f32.mrf.mxu0
    %v1783 = vadd.f32 %v1540, %v1782
    %v1784 = vpop.f32.mrf.mxu0
    %v1785 = vpop.f32.mrf.mxu0
    %v1786 = vpop.f32.mrf.mxu0
    %1787 = vdwg.mxu0
    %v1788 = vpack.c.bf16 %v1484, %v1484
    %v1789 = vld [vmem:[%s11] sm:$0xff]
    %v1790 = vld [vmem:[%s11 + $0x8] sm:$0xf]
    %v1791 = vld [vmem:[%s11 + $0xc] sm:$0xff]
    %v1792 = vld [vmem:[%s11 + $0x14] sm:$0xf]
    %v1793 = vld [vmem:[%s11 + $0x18] sm:$0xff]
    %v1794 = vld [vmem:[%s11 + $0x20] sm:$0xf]
    %v1795 = vld [vmem:[%s11 + $0x24] sm:$0xff]
    %v1796 = vld [vmem:[%s11 + $0x2c] sm:$0xf]
    %v1797 = vld [vmem:[%s11 + $0x30] sm:$0xff]
    %v1798 = vld [vmem:[%s11 + $0x38] sm:$0xf]
    %v1799 = vld [vmem:[%s11 + $0x3c] sm:$0xff]
    %v1800 = vld [vmem:[%s11 + $0x44] sm:$0xf]
    %v1801 = vld [vmem:[%s11 + $0x48] sm:$0xff]
    %v1802 = vld [vmem:[%s11 + $0x50] sm:$0xf]
    %v1803 = vld [vmem:[%s11 + $0x54] sm:$0xff]
    %v1804 = vld [vmem:[%s11 + $0x5c] sm:$0xf]
    %v1805 = vld [vmem:[%s13] sm:$0x7]
    %v1807 = vlaneseq
    %v1808 = vshrl.u32 %v1807, 7
    %v1809 = vsub.s32 0, %v1808
    %v1810 = vrot.slane %v1805, %v1809
    %v1811 = vlaneseq
    %v1812 = vshrl.u32 %v1811, 7
    %v1813 = vsub.s32 1, %v1812
    %v1814 = vrot.slane %v1805, %v1813
    %v1815 = vlaneseq
    %v1816 = vshrl.u32 %v1815, 7
    %v1817 = vsub.s32 2, %v1816
    %v1818 = vrot.slane %v1805, %v1817
    %v1838 = vunpack.c.l.b16 %v1789
    %v1839 = vunpack.c.h.b16 %v1789
    %v1840 = vunpack.c.l.b16 %v1790
    %v1841 = vunpack.c.l.b16 %v1791
    %v1842 = vunpack.c.h.b16 %v1791
    %v1843 = vunpack.c.l.b16 %v1792
    %v1844 = vunpack.c.l.b16 %v1793
    %v1845 = vunpack.c.h.b16 %v1793
    %v1846 = vunpack.c.l.b16 %v1794
    %v1847 = vunpack.c.l.b16 %v1795
    %v1848 = vunpack.c.h.b16 %v1795
    %v1849 = vunpack.c.l.b16 %v1796
    %v1850 = vunpack.c.l.b16 %v1797
    %v1851 = vunpack.c.h.b16 %v1797
    %v1852 = vunpack.c.l.b16 %v1798
    %v1853 = vunpack.c.l.b16 %v1799
    %v1854 = vunpack.c.h.b16 %v1799
    %v1855 = vunpack.c.l.b16 %v1800
    %v1856 = vunpack.c.l.b16 %v1801
    %v1857 = vunpack.c.h.b16 %v1801
    %v1858 = vunpack.c.l.b16 %v1802
    %v1859 = vunpack.c.l.b16 %v1803
    %v1860 = vunpack.c.h.b16 %v1803
    %v1861 = vunpack.c.l.b16 %v1804
    %v1862 = vpack.c.b16 %v1841, %v1838
    %v1863 = vpack.c.b16 %v1842, %v1839
    %v1864 = vpack.c.b16 %v1843, %v1840
    %v1865 = vpack.c.b16 %v1847, %v1844
    %v1866 = vpack.c.b16 %v1848, %v1845
    %v1867 = vpack.c.b16 %v1849, %v1846
    %v1868 = vpack.c.b16 %v1853, %v1850
    %v1869 = vpack.c.b16 %v1854, %v1851
    %v1870 = vpack.c.b16 %v1855, %v1852
    %v1871 = vpack.c.b16 %v1859, %v1856
    %v1872 = vpack.c.b16 %v1860, %v1857
    %v1873 = vpack.c.b16 %v1861, %v1858
    %v1887 = vsel %vm236, %v1788, 0
    %1889 = vmatprep.subr.bf16.mxu0 0
    %1890 = vmatpush1.bf16.msra.mxu0 0
    %1891 = vmatprep.subr.bf16.mxu0 0
    %1892 = vmatpush1.bf16.msra.mxu0 0
    %1893 = vmatprep.subr.bf16.mxu0 0
    %1894 = vmatpush1.bf16.msra.mxu0 0
    %1895 = vmatprep.subr.bf16.mxu0 0
    %1896 = vmatpush1.bf16.msra.mxu0 0
    %1897 = vmatprep.subr.bf16.mxu0 %v1872
    %1898 = vmatpush1.bf16.msra.mxu0 %v1871
    %1899 = vmatprep.subr.bf16.mxu0 %v1869
    %1900 = vmatpush1.bf16.msra.mxu0 %v1868
    %1901 = vmatprep.subr.bf16.mxu0 %v1866
    %1902 = vmatpush1.bf16.msra.mxu0 %v1865
    %1903 = vmatprep.subr.bf16.mxu0 %v1863
    %1904 = vmatpush1.bf16.msra.mxu0 %v1862
    %1905 = vmatprep.subr.bf16.mxu0 0
    %1906 = vmatpush2.bf16.msra.mxu0 0
    %1907 = vmatprep.subr.bf16.mxu0 0
    %1908 = vmatpush2.bf16.msra.mxu0 0
    %1909 = vmatprep.subr.bf16.mxu0 0
    %1910 = vmatpush2.bf16.msra.mxu0 0
    %1911 = vmatprep.subr.bf16.mxu0 0
    %1912 = vmatpush2.bf16.msra.mxu0 0
    %1913 = vmatprep.subr.bf16.mxu0 0
    %1914 = vmatpush2.bf16.msra.mxu0 0
    %1915 = vmatprep.subr.bf16.mxu0 0
    %1916 = vmatpush2.bf16.msra.mxu0 0
    %1917 = vmatprep.subr.bf16.mxu0 0
    %1918 = vmatpush2.bf16.msra.mxu0 0
    %1919 = vmatprep.subr.bf16.mxu0 0
    %1920 = vmatpush2.bf16.msra.mxu0 0
    %1921 = vmatprep.mubr.bf16.mxu0 0
    %1922 = vmatmul.mubr.bf16.gmra.mxu0 %v1887
    %v1923 = vpop.f32.mrf.mxu0
    %v1924 = vadd.f32 %v1810, %v1923
    %v1925 = vpop.f32.mrf.mxu0
    %v1926 = vadd.f32 %v1814, %v1925
    %v1927 = vpop.f32.mrf.mxu0
    %v1928 = vpop.f32.mrf.mxu0
    %1929 = vdwg.mxu0
    %1930 = vmatprep.subr.bf16.mxu0 0
    %1931 = vmatpush1.bf16.msra.mxu0 0
    %1932 = vmatprep.subr.bf16.mxu0 0
    %1933 = vmatpush1.bf16.msra.mxu0 0
    %1934 = vmatprep.subr.bf16.mxu0 0
    %1935 = vmatpush1.bf16.msra.mxu0 0
    %1936 = vmatprep.subr.bf16.mxu0 0
    %1937 = vmatpush1.bf16.msra.mxu0 0
    %1938 = vmatprep.subr.bf16.mxu0 0
    %1939 = vmatpush1.bf16.msra.mxu0 %v1873
    %1940 = vmatprep.subr.bf16.mxu0 0
    %1941 = vmatpush1.bf16.msra.mxu0 %v1870
    %1942 = vmatprep.subr.bf16.mxu0 0
    %1943 = vmatpush1.bf16.msra.mxu0 %v1867
    %1944 = vmatprep.subr.bf16.mxu0 0
    %1945 = vmatpush1.bf16.msra.mxu0 %v1864
    %1946 = vmatprep.subr.bf16.mxu0 0
    %1947 = vmatpush2.bf16.msra.mxu0 0
    %1948 = vmatprep.subr.bf16.mxu0 0
    %1949 = vmatpush2.bf16.msra.mxu0 0
    %1950 = vmatprep.subr.bf16.mxu0 0
    %1951 = vmatpush2.bf16.msra.mxu0 0
    %1952 = vmatprep.subr.bf16.mxu0 0
    %1953 = vmatpush2.bf16.msra.mxu0 0
    %1954 = vmatprep.subr.bf16.mxu0 0
    %1955 = vmatpush2.bf16.msra.mxu0 0
    %1956 = vmatprep.subr.bf16.mxu0 0
    %1957 = vmatpush2.bf16.msra.mxu0 0
    %1958 = vmatprep.subr.bf16.mxu0 0
    %1959 = vmatpush2.bf16.msra.mxu0 0
    %1960 = vmatprep.subr.bf16.mxu0 0
    %1961 = vmatpush2.bf16.msra.mxu0 0
    %1962 = vmatprep.mubr.bf16.mxu0 0
    %1963 = vmatmul.mubr.bf16.gmra.mxu0 %v1887
    %v1964 = vpop.f32.mrf.mxu0
    %v1965 = vadd.f32 %v1818, %v1964
    %v1966 = vpop.f32.mrf.mxu0
    %v1967 = vpop.f32.mrf.mxu0
    %v1968 = vpop.f32.mrf.mxu0
    %1969 = vdwg.mxu0
    %v1970 = vadd.f32 %v1742, %v1924
    %v1971 = vxor.u32 %v1970, 2147483648
    %v1972 = vmul.f32 %v1971, 1.442695
    %v1973 = vpow.pop %v1972
    %v1974 = vadd.f32 %v1973, 1.0
    %v1975 = vrcp.pop %v1974
    %v1976 = vmul.f32 1.0, %v1975
    %v1977 = vadd.f32 %v1744, %v1926
    %v1978 = vxor.u32 %v1977, 2147483648
    %v1979 = vmul.f32 %v1978, 1.442695
    %v1980 = vpow.pop %v1979
    %v1981 = vadd.f32 %v1980, 1.0
    %v1982 = vrcp.pop %v1981
    %v1983 = vmul.f32 1.0, %v1982
    %v1984 = vmul.f32 %v1976, %v1965
    %v1985 = vadd.f32 %v1783, %v1984
    %v1986 = vtanh.pop %v1985
    %v1987 = vsel %vm236, %v1484, 0.0
    %v1988 = vsub.f32 1.0, %v1983
    %v1989 = vmul.f32 %v1988, %v1986
    %v1990 = vmul.f32 %v1983, %v1987
    %v1991 = vadd.f32 %v1989, %v1990
    %1992 = vst.msk [vmem:[#allocation18] sm:$0xff] %vm236, %v1991
    %v1993 = vld [vmem:[%s178] sm:$0xff]
    %v1994 = vpack.c.bf16 %v1991, %v1991
    %v1995 = vld [vmem:[#allocation11] sm:$0xff]
    %v1996 = vld [vmem:[#allocation11 + $0x8] sm:$0xf]
    %v1997 = vld [vmem:[#allocation11 + $0xc] sm:$0xff]
    %v1998 = vld [vmem:[#allocation11 + $0x14] sm:$0xf]
    %v1999 = vld [vmem:[#allocation11 + $0x18] sm:$0xff]
    %v2000 = vld [vmem:[#allocation11 + $0x20] sm:$0xf]
    %v2001 = vld [vmem:[#allocation11 + $0x24] sm:$0xff]
    %v2002 = vld [vmem:[#allocation11 + $0x2c] sm:$0xf]
    %v2003 = vld [vmem:[#allocation11 + $0x30] sm:$0xff]
    %v2004 = vld [vmem:[#allocation11 + $0x38] sm:$0xf]
    %v2005 = vld [vmem:[#allocation11 + $0x3c] sm:$0xff]
    %v2006 = vld [vmem:[#allocation11 + $0x44] sm:$0xf]
    %v2007 = vld [vmem:[#allocation11 + $0x48] sm:$0xff]
    %v2008 = vld [vmem:[#allocation11 + $0x50] sm:$0xf]
    %v2009 = vld [vmem:[#allocation11 + $0x54] sm:$0xff]
    %v2010 = vld [vmem:[#allocation11 + $0x5c] sm:$0xf]
    %v2011 = vld [vmem:[#allocation11 + $0x60] sm:$0xff]
    %v2012 = vld [vmem:[#allocation11 + $0x68] sm:$0xf]
    %v2013 = vld [vmem:[#allocation11 + $0x6c] sm:$0xff]
    %v2014 = vld [vmem:[#allocation11 + $0x74] sm:$0xf]
    %v2015 = vld [vmem:[#allocation11 + $0x78] sm:$0xff]
    %v2016 = vld [vmem:[#allocation11 + $0x80] sm:$0xf]
    %v2017 = vld [vmem:[#allocation11 + $0x84] sm:$0xff]
    %v2018 = vld [vmem:[#allocation11 + $0x8c] sm:$0xf]
    %v2019 = vld [vmem:[#allocation11 + $0x90] sm:$0xff]
    %v2020 = vld [vmem:[#allocation11 + $0x98] sm:$0xf]
    %v2021 = vld [vmem:[#allocation11 + $0x9c] sm:$0xff]
    %v2022 = vld [vmem:[#allocation11 + $0xa4] sm:$0xf]
    %v2023 = vld [vmem:[#allocation11 + $0xa8] sm:$0xff]
    %v2024 = vld [vmem:[#allocation11 + $0xb0] sm:$0xf]
    %v2025 = vld [vmem:[#allocation11 + $0xb4] sm:$0xff]
    %v2026 = vld [vmem:[#allocation11 + $0xbc] sm:$0xf]
    %v2027 = vld [vmem:[%s16] sm:$0x7]
    %v2029 = vlaneseq
    %v2030 = vshrl.u32 %v2029, 7
    %v2031 = vsub.s32 0, %v2030
    %v2032 = vrot.slane %v2027, %v2031
    %v2033 = vlaneseq
    %v2034 = vshrl.u32 %v2033, 7
    %v2035 = vsub.s32 1, %v2034
    %v2036 = vrot.slane %v2027, %v2035
    %v2037 = vlaneseq
    %v2038 = vshrl.u32 %v2037, 7
    %v2039 = vsub.s32 2, %v2038
    %v2040 = vrot.slane %v2027, %v2039
    %v2076 = vunpack.c.l.b16 %v1995
    %v2077 = vunpack.c.h.b16 %v1995
    %v2078 = vunpack.c.l.b16 %v1996
    %v2079 = vunpack.c.l.b16 %v1997
    %v2080 = vunpack.c.h.b16 %v1997
    %v2081 = vunpack.c.l.b16 %v1998
    %v2082 = vunpack.c.l.b16 %v1999
    %v2083 = vunpack.c.h.b16 %v1999
    %v2084 = vunpack.c.l.b16 %v2000
    %v2085 = vunpack.c.l.b16 %v2001
    %v2086 = vunpack.c.h.b16 %v2001
    %v2087 = vunpack.c.l.b16 %v2002
    %v2088 = vunpack.c.l.b16 %v2003
    %v2089 = vunpack.c.h.b16 %v2003
    %v2090 = vunpack.c.l.b16 %v2004
    %v2091 = vunpack.c.l.b16 %v2005
    %v2092 = vunpack.c.h.b16 %v2005
    %v2093 = vunpack.c.l.b16 %v2006
    %v2094 = vunpack.c.l.b16 %v2007
    %v2095 = vunpack.c.h.b16 %v2007
    %v2096 = vunpack.c.l.b16 %v2008
    %v2097 = vunpack.c.l.b16 %v2009
    %v2098 = vunpack.c.h.b16 %v2009
    %v2099 = vunpack.c.l.b16 %v2010
    %v2100 = vunpack.c.l.b16 %v2011
    %v2101 = vunpack.c.h.b16 %v2011
    %v2102 = vunpack.c.l.b16 %v2012
    %v2103 = vunpack.c.l.b16 %v2013
    %v2104 = vunpack.c.h.b16 %v2013
    %v2105 = vunpack.c.l.b16 %v2014
    %v2106 = vunpack.c.l.b16 %v2015
    %v2107 = vunpack.c.h.b16 %v2015
    %v2108 = vunpack.c.l.b16 %v2016
    %v2109 = vunpack.c.l.b16 %v2017
    %v2110 = vunpack.c.h.b16 %v2017
    %v2111 = vunpack.c.l.b16 %v2018
    %v2112 = vunpack.c.l.b16 %v2019
    %v2113 = vunpack.c.h.b16 %v2019
    %v2114 = vunpack.c.l.b16 %v2020
    %v2115 = vunpack.c.l.b16 %v2021
    %v2116 = vunpack.c.h.b16 %v2021
    %v2117 = vunpack.c.l.b16 %v2022
    %v2118 = vunpack.c.l.b16 %v2023
    %v2119 = vunpack.c.h.b16 %v2023
    %v2120 = vunpack.c.l.b16 %v2024
    %v2121 = vunpack.c.l.b16 %v2025
    %v2122 = vunpack.c.h.b16 %v2025
    %v2123 = vunpack.c.l.b16 %v2026
    %v2124 = vpack.c.b16 %v2079, %v2076
    %v2125 = vpack.c.b16 %v2080, %v2077
    %v2126 = vpack.c.b16 %v2081, %v2078
    %v2127 = vpack.c.b16 %v2085, %v2082
    %v2128 = vpack.c.b16 %v2086, %v2083
    %v2129 = vpack.c.b16 %v2087, %v2084
    %v2130 = vpack.c.b16 %v2091, %v2088
    %v2131 = vpack.c.b16 %v2092, %v2089
    %v2132 = vpack.c.b16 %v2093, %v2090
    %v2133 = vpack.c.b16 %v2097, %v2094
    %v2134 = vpack.c.b16 %v2098, %v2095
    %v2135 = vpack.c.b16 %v2099, %v2096
    %v2136 = vpack.c.b16 %v2103, %v2100
    %v2137 = vpack.c.b16 %v2104, %v2101
    %v2138 = vpack.c.b16 %v2105, %v2102
    %v2139 = vpack.c.b16 %v2109, %v2106
    %v2140 = vpack.c.b16 %v2110, %v2107
    %v2141 = vpack.c.b16 %v2111, %v2108
    %v2142 = vpack.c.b16 %v2115, %v2112
    %v2143 = vpack.c.b16 %v2116, %v2113
    %v2144 = vpack.c.b16 %v2117, %v2114
    %v2145 = vpack.c.b16 %v2121, %v2118
    %v2146 = vpack.c.b16 %v2122, %v2119
    %v2147 = vpack.c.b16 %v2123, %v2120
    %2172 = vmatprep.subr.bf16.mxu0 %v2146
    %2173 = vmatpush1.bf16.msra.mxu0 %v2145
    %2174 = vmatprep.subr.bf16.mxu0 %v2143
    %2175 = vmatpush1.bf16.msra.mxu0 %v2142
    %2176 = vmatprep.subr.bf16.mxu0 %v2140
    %2177 = vmatpush1.bf16.msra.mxu0 %v2139
    %2178 = vmatprep.subr.bf16.mxu0 %v2137
    %2179 = vmatpush1.bf16.msra.mxu0 %v2136
    %2180 = vmatprep.subr.bf16.mxu0 %v2134
    %2181 = vmatpush1.bf16.msra.mxu0 %v2133
    %2182 = vmatprep.subr.bf16.mxu0 %v2131
    %2183 = vmatpush1.bf16.msra.mxu0 %v2130
    %2184 = vmatprep.subr.bf16.mxu0 %v2128
    %2185 = vmatpush1.bf16.msra.mxu0 %v2127
    %2186 = vmatprep.subr.bf16.mxu0 %v2125
    %2187 = vmatpush1.bf16.msra.mxu0 %v2124
    %2188 = vmatprep.subr.bf16.mxu0 0
    %2189 = vmatpush2.bf16.msra.mxu0 0
    %2190 = vmatprep.subr.bf16.mxu0 0
    %2191 = vmatpush2.bf16.msra.mxu0 0
    %2192 = vmatprep.subr.bf16.mxu0 0
    %2193 = vmatpush2.bf16.msra.mxu0 0
    %2194 = vmatprep.subr.bf16.mxu0 0
    %2195 = vmatpush2.bf16.msra.mxu0 0
    %2196 = vmatprep.subr.bf16.mxu0 0
    %2197 = vmatpush2.bf16.msra.mxu0 0
    %2198 = vmatprep.subr.bf16.mxu0 0
    %2199 = vmatpush2.bf16.msra.mxu0 0
    %2200 = vmatprep.subr.bf16.mxu0 0
    %2201 = vmatpush2.bf16.msra.mxu0 0
    %2202 = vmatprep.subr.bf16.mxu0 0
    %2203 = vmatpush2.bf16.msra.mxu0 0
    %2204 = vmatprep.mubr.bf16.mxu0 0
    %2205 = vmatmul.mubr.bf16.gmra.mxu0 %v1994
    %v2206 = vpop.f32.mrf.mxu0
    %v2207 = vadd.f32 %v2032, %v2206
    %v2208 = vpop.f32.mrf.mxu0
    %v2209 = vadd.f32 %v2036, %v2208
    %v2210 = vpop.f32.mrf.mxu0
    %v2211 = vpop.f32.mrf.mxu0
    %2212 = vdwg.mxu0
    %2213 = vmatprep.subr.bf16.mxu0 0
    %2214 = vmatpush1.bf16.msra.mxu0 %v2147
    %2215 = vmatprep.subr.bf16.mxu0 0
    %2216 = vmatpush1.bf16.msra.mxu0 %v2144
    %2217 = vmatprep.subr.bf16.mxu0 0
    %2218 = vmatpush1.bf16.msra.mxu0 %v2141
    %2219 = vmatprep.subr.bf16.mxu0 0
    %2220 = vmatpush1.bf16.msra.mxu0 %v2138
    %2221 = vmatprep.subr.bf16.mxu0 0
    %2222 = vmatpush1.bf16.msra.mxu0 %v2135
    %2223 = vmatprep.subr.bf16.mxu0 0
    %2224 = vmatpush1.bf16.msra.mxu0 %v2132
    %2225 = vmatprep.subr.bf16.mxu0 0
    %2226 = vmatpush1.bf16.msra.mxu0 %v2129
    %2227 = vmatprep.subr.bf16.mxu0 0
    %2228 = vmatpush1.bf16.msra.mxu0 %v2126
    %2229 = vmatprep.subr.bf16.mxu0 0
    %2230 = vmatpush2.bf16.msra.mxu0 0
    %2231 = vmatprep.subr.bf16.mxu0 0
    %2232 = vmatpush2.bf16.msra.mxu0 0
    %2233 = vmatprep.subr.bf16.mxu0 0
    %2234 = vmatpush2.bf16.msra.mxu0 0
    %2235 = vmatprep.subr.bf16.mxu0 0
    %2236 = vmatpush2.bf16.msra.mxu0 0
    %2237 = vmatprep.subr.bf16.mxu0 0
    %2238 = vmatpush2.bf16.msra.mxu0 0
    %2239 = vmatprep.subr.bf16.mxu0 0
    %2240 = vmatpush2.bf16.msra.mxu0 0
    %2241 = vmatprep.subr.bf16.mxu0 0
    %2242 = vmatpush2.bf16.msra.mxu0 0
    %2243 = vmatprep.subr.bf16.mxu0 0
    %2244 = vmatpush2.bf16.msra.mxu0 0
    %2245 = vmatprep.mubr.bf16.mxu0 0
    %2246 = vmatmul.mubr.bf16.gmra.mxu0 %v1994
    %v2247 = vpop.f32.mrf.mxu0
    %v2248 = vadd.f32 %v2040, %v2247
    %v2249 = vpop.f32.mrf.mxu0
    %v2250 = vpop.f32.mrf.mxu0
    %v2251 = vpop.f32.mrf.mxu0
    %2252 = vdwg.mxu0
    %v2253 = vpack.c.bf16 %v1993, %v1993
    %v2254 = vld [vmem:[#allocation12] sm:$0xff]
    %v2255 = vld [vmem:[#allocation12 + $0x8] sm:$0xf]
    %v2256 = vld [vmem:[#allocation12 + $0xc] sm:$0xff]
    %v2257 = vld [vmem:[#allocation12 + $0x14] sm:$0xf]
    %v2258 = vld [vmem:[#allocation12 + $0x18] sm:$0xff]
    %v2259 = vld [vmem:[#allocation12 + $0x20] sm:$0xf]
    %v2260 = vld [vmem:[#allocation12 + $0x24] sm:$0xff]
    %v2261 = vld [vmem:[#allocation12 + $0x2c] sm:$0xf]
    %v2262 = vld [vmem:[#allocation12 + $0x30] sm:$0xff]
    %v2263 = vld [vmem:[#allocation12 + $0x38] sm:$0xf]
    %v2264 = vld [vmem:[#allocation12 + $0x3c] sm:$0xff]
    %v2265 = vld [vmem:[#allocation12 + $0x44] sm:$0xf]
    %v2266 = vld [vmem:[#allocation12 + $0x48] sm:$0xff]
    %v2267 = vld [vmem:[#allocation12 + $0x50] sm:$0xf]
    %v2268 = vld [vmem:[#allocation12 + $0x54] sm:$0xff]
    %v2269 = vld [vmem:[#allocation12 + $0x5c] sm:$0xf]
    %v2270 = vld [vmem:[%s17] sm:$0x7]
    %v2272 = vlaneseq
    %v2273 = vshrl.u32 %v2272, 7
    %v2274 = vsub.s32 0, %v2273
    %v2275 = vrot.slane %v2270, %v2274
    %v2276 = vlaneseq
    %v2277 = vshrl.u32 %v2276, 7
    %v2278 = vsub.s32 1, %v2277
    %v2279 = vrot.slane %v2270, %v2278
    %v2280 = vlaneseq
    %v2281 = vshrl.u32 %v2280, 7
    %v2282 = vsub.s32 2, %v2281
    %v2283 = vrot.slane %v2270, %v2282
    %v2303 = vunpack.c.l.b16 %v2254
    %v2304 = vunpack.c.h.b16 %v2254
    %v2305 = vunpack.c.l.b16 %v2255
    %v2306 = vunpack.c.l.b16 %v2256
    %v2307 = vunpack.c.h.b16 %v2256
    %v2308 = vunpack.c.l.b16 %v2257
    %v2309 = vunpack.c.l.b16 %v2258
    %v2310 = vunpack.c.h.b16 %v2258
    %v2311 = vunpack.c.l.b16 %v2259
    %v2312 = vunpack.c.l.b16 %v2260
    %v2313 = vunpack.c.h.b16 %v2260
    %v2314 = vunpack.c.l.b16 %v2261
    %v2315 = vunpack.c.l.b16 %v2262
    %v2316 = vunpack.c.h.b16 %v2262
    %v2317 = vunpack.c.l.b16 %v2263
    %v2318 = vunpack.c.l.b16 %v2264
    %v2319 = vunpack.c.h.b16 %v2264
    %v2320 = vunpack.c.l.b16 %v2265
    %v2321 = vunpack.c.l.b16 %v2266
    %v2322 = vunpack.c.h.b16 %v2266
    %v2323 = vunpack.c.l.b16 %v2267
    %v2324 = vunpack.c.l.b16 %v2268
    %v2325 = vunpack.c.h.b16 %v2268
    %v2326 = vunpack.c.l.b16 %v2269
    %v2327 = vpack.c.b16 %v2306, %v2303
    %v2328 = vpack.c.b16 %v2307, %v2304
    %v2329 = vpack.c.b16 %v2308, %v2305
    %v2330 = vpack.c.b16 %v2312, %v2309
    %v2331 = vpack.c.b16 %v2313, %v2310
    %v2332 = vpack.c.b16 %v2314, %v2311
    %v2333 = vpack.c.b16 %v2318, %v2315
    %v2334 = vpack.c.b16 %v2319, %v2316
    %v2335 = vpack.c.b16 %v2320, %v2317
    %v2336 = vpack.c.b16 %v2324, %v2321
    %v2337 = vpack.c.b16 %v2325, %v2322
    %v2338 = vpack.c.b16 %v2326, %v2323
    %v2352 = vsel %vm236, %v2253, 0
    %2354 = vmatprep.subr.bf16.mxu0 0
    %2355 = vmatpush1.bf16.msra.mxu0 0
    %2356 = vmatprep.subr.bf16.mxu0 0
    %2357 = vmatpush1.bf16.msra.mxu0 0
    %2358 = vmatprep.subr.bf16.mxu0 0
    %2359 = vmatpush1.bf16.msra.mxu0 0
    %2360 = vmatprep.subr.bf16.mxu0 0
    %2361 = vmatpush1.bf16.msra.mxu0 0
    %2362 = vmatprep.subr.bf16.mxu0 %v2337
    %2363 = vmatpush1.bf16.msra.mxu0 %v2336
    %2364 = vmatprep.subr.bf16.mxu0 %v2334
    %2365 = vmatpush1.bf16.msra.mxu0 %v2333
    %2366 = vmatprep.subr.bf16.mxu0 %v2331
    %2367 = vmatpush1.bf16.msra.mxu0 %v2330
    %2368 = vmatprep.subr.bf16.mxu0 %v2328
    %2369 = vmatpush1.bf16.msra.mxu0 %v2327
    %2370 = vmatprep.subr.bf16.mxu0 0
    %2371 = vmatpush2.bf16.msra.mxu0 0
    %2372 = vmatprep.subr.bf16.mxu0 0
    %2373 = vmatpush2.bf16.msra.mxu0 0
    %2374 = vmatprep.subr.bf16.mxu0 0
    %2375 = vmatpush2.bf16.msra.mxu0 0
    %2376 = vmatprep.subr.bf16.mxu0 0
    %2377 = vmatpush2.bf16.msra.mxu0 0
    %2378 = vmatprep.subr.bf16.mxu0 0
    %2379 = vmatpush2.bf16.msra.mxu0 0
    %2380 = vmatprep.subr.bf16.mxu0 0
    %2381 = vmatpush2.bf16.msra.mxu0 0
    %2382 = vmatprep.subr.bf16.mxu0 0
    %2383 = vmatpush2.bf16.msra.mxu0 0
    %2384 = vmatprep.subr.bf16.mxu0 0
    %2385 = vmatpush2.bf16.msra.mxu0 0
    %2386 = vmatprep.mubr.bf16.mxu0 0
    %2387 = vmatmul.mubr.bf16.gmra.mxu0 %v2352
    %v2388 = vpop.f32.mrf.mxu0
    %v2389 = vadd.f32 %v2275, %v2388
    %v2390 = vpop.f32.mrf.mxu0
    %v2391 = vadd.f32 %v2279, %v2390
    %v2392 = vpop.f32.mrf.mxu0
    %v2393 = vpop.f32.mrf.mxu0
    %2394 = vdwg.mxu0
    %2395 = vmatprep.subr.bf16.mxu0 0
    %2396 = vmatpush1.bf16.msra.mxu0 0
    %2397 = vmatprep.subr.bf16.mxu0 0
    %2398 = vmatpush1.bf16.msra.mxu0 0
    %2399 = vmatprep.subr.bf16.mxu0 0
    %2400 = vmatpush1.bf16.msra.mxu0 0
    %2401 = vmatprep.subr.bf16.mxu0 0
    %2402 = vmatpush1.bf16.msra.mxu0 0
    %2403 = vmatprep.subr.bf16.mxu0 0
    %2404 = vmatpush1.bf16.msra.mxu0 %v2338
    %2405 = vmatprep.subr.bf16.mxu0 0
    %2406 = vmatpush1.bf16.msra.mxu0 %v2335
    %2407 = vmatprep.subr.bf16.mxu0 0
    %2408 = vmatpush1.bf16.msra.mxu0 %v2332
    %2409 = vmatprep.subr.bf16.mxu0 0
    %2410 = vmatpush1.bf16.msra.mxu0 %v2329
    %2411 = vmatprep.subr.bf16.mxu0 0
    %2412 = vmatpush2.bf16.msra.mxu0 0
    %2413 = vmatprep.subr.bf16.mxu0 0
    %2414 = vmatpush2.bf16.msra.mxu0 0
    %2415 = vmatprep.subr.bf16.mxu0 0
    %2416 = vmatpush2.bf16.msra.mxu0 0
    %2417 = vmatprep.subr.bf16.mxu0 0
    %2418 = vmatpush2.bf16.msra.mxu0 0
    %2419 = vmatprep.subr.bf16.mxu0 0
    %2420 = vmatpush2.bf16.msra.mxu0 0
    %2421 = vmatprep.subr.bf16.mxu0 0
    %2422 = vmatpush2.bf16.msra.mxu0 0
    %2423 = vmatprep.subr.bf16.mxu0 0
    %2424 = vmatpush2.bf16.msra.mxu0 0
    %2425 = vmatprep.subr.bf16.mxu0 0
    %2426 = vmatpush2.bf16.msra.mxu0 0
    %2427 = vmatprep.mubr.bf16.mxu0 0
    %2428 = vmatmul.mubr.bf16.gmra.mxu0 %v2352
    %v2429 = vpop.f32.mrf.mxu0
    %v2430 = vadd.f32 %v2283, %v2429
    %v2431 = vpop.f32.mrf.mxu0
    %v2432 = vpop.f32.mrf.mxu0
    %v2433 = vpop.f32.mrf.mxu0
    %2434 = vdwg.mxu0
    %v2435 = vadd.f32 %v2207, %v2389
    %v2436 = vxor.u32 %v2435, 2147483648
    %v2437 = vmul.f32 %v2436, 1.442695
    %v2438 = vpow.pop %v2437
    %v2439 = vadd.f32 %v2438, 1.0
    %v2440 = vrcp.pop %v2439
    %v2441 = vmul.f32 1.0, %v2440
    %v2442 = vadd.f32 %v2209, %v2391
    %v2443 = vxor.u32 %v2442, 2147483648
    %v2444 = vmul.f32 %v2443, 1.442695
    %v2445 = vpow.pop %v2444
    %v2446 = vadd.f32 %v2445, 1.0
    %v2447 = vrcp.pop %v2446
    %v2448 = vmul.f32 1.0, %v2447
    %v2449 = vmul.f32 %v2441, %v2430
    %v2450 = vadd.f32 %v2248, %v2449
    %v2451 = vtanh.pop %v2450
    %v2452 = vsel %vm236, %v1993, 0.0
    %v2453 = vsub.f32 1.0, %v2448
    %v2454 = vmul.f32 %v2453, %v2451
    %v2455 = vmul.f32 %v2448, %v2452
    %v2456 = vadd.f32 %v2454, %v2455
    %s2457 = scalar_lea.vmem [#allocation18], 8
    %2458 = vst.msk [vmem:[%s2457] sm:$0xff] %vm236, %v2456
    %v2459 = vpack.c.bf16 %v2456, %v2456
    %v2460 = vld [vmem:[#allocation14] sm:$0xf]
    %v2461 = vld [vmem:[#allocation14 + $0x4] sm:$0xf]
    %v2462 = vld [vmem:[#allocation14 + $0x8] sm:$0xf]
    %v2463 = vld [vmem:[#allocation14 + $0xc] sm:$0xf]
    %v2464 = vld [vmem:[#allocation14 + $0x10] sm:$0xf]
    %v2465 = vld [vmem:[#allocation14 + $0x14] sm:$0xf]
    %v2466 = vld [vmem:[#allocation14 + $0x18] sm:$0xf]
    %v2467 = vld [vmem:[#allocation14 + $0x1c] sm:$0xf]
    %v2468 = vld [vmem:[#allocation14 + $0x20] sm:$0xf]
    %v2469 = vld [vmem:[#allocation14 + $0x24] sm:$0xf]
    %v2470 = vld [vmem:[#allocation14 + $0x28] sm:$0xf]
    %v2471 = vld [vmem:[#allocation14 + $0x2c] sm:$0xf]
    %v2472 = vld [vmem:[#allocation14 + $0x30] sm:$0xf]
    %v2473 = vld [vmem:[#allocation14 + $0x34] sm:$0xf]
    %v2474 = vld [vmem:[#allocation14 + $0x38] sm:$0xf]
    %v2475 = vld [vmem:[#allocation14 + $0x3c] sm:$0xf]
    %v2476 = vld [vmem:[#allocation15] sm:$0x1]
    %v2478 = vlaneseq
    %v2479 = vshrl.u32 %v2478, 7
    %v2480 = vsub.s32 0, %v2479
    %v2481 = vrot.slane %v2476, %v2480
    %v2499 = vunpack.c.l.b16 %v2460
    %v2500 = vunpack.c.l.b16 %v2461
    %v2501 = vunpack.c.l.b16 %v2462
    %v2502 = vunpack.c.l.b16 %v2463
    %v2503 = vunpack.c.l.b16 %v2464
    %v2504 = vunpack.c.l.b16 %v2465
    %v2505 = vunpack.c.l.b16 %v2466
    %v2506 = vunpack.c.l.b16 %v2467
    %v2507 = vunpack.c.l.b16 %v2468
    %v2508 = vunpack.c.l.b16 %v2469
    %v2509 = vunpack.c.l.b16 %v2470
    %v2510 = vunpack.c.l.b16 %v2471
    %v2511 = vunpack.c.l.b16 %v2472
    %v2512 = vunpack.c.l.b16 %v2473
    %v2513 = vunpack.c.l.b16 %v2474
    %v2514 = vunpack.c.l.b16 %v2475
    %v2515 = vpack.c.b16 %v2500, %v2499
    %v2516 = vpack.c.b16 %v2502, %v2501
    %v2517 = vpack.c.b16 %v2504, %v2503
    %v2518 = vpack.c.b16 %v2506, %v2505
    %v2519 = vpack.c.b16 %v2508, %v2507
    %v2520 = vpack.c.b16 %v2510, %v2509
    %v2521 = vpack.c.b16 %v2512, %v2511
    %v2522 = vpack.c.b16 %v2514, %v2513
    %2531 = vmatprep.subr.bf16.mxu0 0
    %2532 = vmatpush1.bf16.msra.mxu0 %v2522
    %2533 = vmatprep.subr.bf16.mxu0 0
    %2534 = vmatpush1.bf16.msra.mxu0 %v2521
    %2535 = vmatprep.subr.bf16.mxu0 0
    %2536 = vmatpush1.bf16.msra.mxu0 %v2520
    %2537 = vmatprep.subr.bf16.mxu0 0
    %2538 = vmatpush1.bf16.msra.mxu0 %v2519
    %2539 = vmatprep.subr.bf16.mxu0 0
    %2540 = vmatpush1.bf16.msra.mxu0 %v2518
    %2541 = vmatprep.subr.bf16.mxu0 0
    %2542 = vmatpush1.bf16.msra.mxu0 %v2517
    %2543 = vmatprep.subr.bf16.mxu0 0
    %2544 = vmatpush1.bf16.msra.mxu0 %v2516
    %2545 = vmatprep.subr.bf16.mxu0 0
    %2546 = vmatpush1.bf16.msra.mxu0 %v2515
    %2547 = vmatprep.subr.bf16.mxu0 0
    %2548 = vmatpush2.bf16.msra.mxu0 0
    %2549 = vmatprep.subr.bf16.mxu0 0
    %2550 = vmatpush2.bf16.msra.mxu0 0
    %2551 = vmatprep.subr.bf16.mxu0 0
    %2552 = vmatpush2.bf16.msra.mxu0 0
    %2553 = vmatprep.subr.bf16.mxu0 0
    %2554 = vmatpush2.bf16.msra.mxu0 0
    %2555 = vmatprep.subr.bf16.mxu0 0
    %2556 = vmatpush2.bf16.msra.mxu0 0
    %2557 = vmatprep.subr.bf16.mxu0 0
    %2558 = vmatpush2.bf16.msra.mxu0 0
    %2559 = vmatprep.subr.bf16.mxu0 0
    %2560 = vmatpush2.bf16.msra.mxu0 0
    %2561 = vmatprep.subr.bf16.mxu0 0
    %2562 = vmatpush2.bf16.msra.mxu0 0
    %2563 = vmatprep.mubr.bf16.mxu0 0
    %2564 = vmatmul.mubr.bf16.gmra.mxu0 %v2459
    %v2565 = vpop.f32.mrf.mxu0
    %v2566 = vadd.f32 %v2481, %v2565
    %v2567 = vpop.f32.mrf.mxu0
    %v2568 = vpop.f32.mrf.mxu0
    %v2569 = vpop.f32.mrf.mxu0
    %2570 = vdwg.mxu0
    %2571 = vmax.xlane.f32.xlu0 %v2566
    %v2572 = vpop.xlane.xlu0 %2571
    %v2573 = vsub.f32 %v2566, %v2572
    %v2574 = vmul.f32 %v2573, 1.442695
    %v2575 = vpow.pop %v2574
    %2576 = vadd.xlane.f32.xlu0 %v2575
    %v2577 = vpop.xlane.xlu0 %2576
    %v2578 = vrcp.pop %v2577
    %v2579 = vmul.f32 %v2575, %v2578
    %2580 = vst [vmem:[#allocation17] sm:$0xff] %v2579
    // Predicated region
    $region114: #{recurrent_decoder_forward.1} parent=1 // pred_check
      _
    $region115: #{recurrent_decoder_forward.1} parent=1 // pred_check_branch
      %2582 = sbr.rel (0) target = $region117
    $region116: #{recurrent_decoder_forward.1} parent=1 // pred_region
      %s2584 = ssub.s32 128, 128
      %2585 = vsyncadd [#allocation5], %s2584
      %s2587 = sshll.u32 [#allocation17], 4
      %s2588 = int_to_ptr.vmem [resolvable:$true] %s2587
      %2590 = dma.vmem_to_hbm [thread:$0]  %s2588, 128, %s20, [#allocation5]
    $region117: #{recurrent_decoder_forward.1} parent=1 // pred_fallthru
      _
    // Predicated region
    $region118: #{recurrent_decoder_forward.1} parent=1 // pred_check
      _
    $region119: #{recurrent_decoder_forward.1} parent=1 // pred_check_branch
      %2592 = sbr.rel (0) target = $region121
    $region120: #{recurrent_decoder_forward.1} parent=1 // pred_region
      %s2594 = ssub.s32 256, 256
      %2595 = vsyncadd [#allocation19], %s2594
      %s2596 = sshll.u32 [#allocation18], 4
      %s2597 = int_to_ptr.vmem [resolvable:$true] %s2596
      %2602 = dma.vmem_to_hbm [thread:$0]  %s2597, 256, %s21, [#allocation19], 128, 128, 8
    $region121: #{recurrent_decoder_forward.1} parent=1 // pred_fallthru
      _
    // Predicated region
    $region122: #{recurrent_decoder_forward.1} parent=1 // pred_check
      _
    $region123: #{recurrent_decoder_forward.1} parent=1 // pred_check_branch
      %2604 = sbr.rel (0) target = $region125
    $region124: #{recurrent_decoder_forward.1} parent=1 // pred_region
      _
    $region125: #{recurrent_decoder_forward.1} parent=1 // pred_fallthru
      _
    // Predicated region
    $region126: #{recurrent_decoder_forward.1} parent=1 // pred_check
      _
    $region127: #{recurrent_decoder_forward.1} parent=1 // pred_check_branch
      %2606 = sbr.rel (0) target = $region129
    $region128: #{recurrent_decoder_forward.1} parent=1 // pred_region
      %s2608 = ssub.s32 128, 128
      %2609 = vsyncadd [#allocation19], %s2608
      %s2611 = sshll.u32 [#allocation20], 4
      %s2612 = int_to_ptr.vmem [resolvable:$true] %s2611
      %2614 = dma.vmem_to_hbm [thread:$0]  %s2612, 128, %s23, [#allocation19]
    $region129: #{recurrent_decoder_forward.1} parent=1 // pred_fallthru
      _
    // Predicated region
    $region130: #{recurrent_decoder_forward.1} parent=1 // pred_check
      _
    $region131: #{recurrent_decoder_forward.1} parent=1 // pred_check_branch
      %2616 = sbr.rel (0) target = $region133
    $region132: #{recurrent_decoder_forward.1} parent=1 // pred_region
      %2617 = dma.done [#allocation5], 128
    $region133: #{recurrent_decoder_forward.1} parent=1 // pred_fallthru
      _
    // Predicated region
    $region134: #{recurrent_decoder_forward.1} parent=1 // pred_check
      _
    $region135: #{recurrent_decoder_forward.1} parent=1 // pred_check_branch
      %2619 = sbr.rel (0) target = $region137
    $region136: #{recurrent_decoder_forward.1} parent=1 // pred_region
      %2620 = dma.done [#allocation19], 256
    $region137: #{recurrent_decoder_forward.1} parent=1 // pred_fallthru
      _
    // Predicated region
    $region138: #{recurrent_decoder_forward.1} parent=1 // pred_check
      _
    $region139: #{recurrent_decoder_forward.1} parent=1 // pred_check_branch
      %2622 = sbr.rel (0) target = $region141
    $region140: #{recurrent_decoder_forward.1} parent=1 // pred_region
      _
    $region141: #{recurrent_decoder_forward.1} parent=1 // pred_fallthru
      _
    // Predicated region
    $region142: #{recurrent_decoder_forward.1} parent=1 // pred_check
      _
    $region143: #{recurrent_decoder_forward.1} parent=1 // pred_check_branch
      %2624 = sbr.rel (0) target = $region145
    $region144: #{recurrent_decoder_forward.1} parent=1 // pred_region
      %2625 = dma.done [#allocation19], 128
    $region145: #{recurrent_decoder_forward.1} parent=1 // pred_fallthru
      _
    %2626 = vsyncpa [#allocation4], 1
    %2627 = vsyncpa [#allocation7], 1
    %2628 = vsyncpa [#allocation10], 1
    %2629 = vsyncpa [#allocation13], 1
    %2630 = vsyncpa [#allocation16], 1
    %2631 = vsyncpa [#allocation5], 1
    %2632 = vsyncpa [#allocation19], 1

</llo_original>
